<compile_context>
chip_gen: v5e
topology: v5e:2x2
jax: 0.10.0
libtpu: 0.0.40
codegen_flags: <defaults>
</compile_context>

<pallas_src>
import math

import jax
import jax.numpy as jnp
from jax.experimental import pallas as pl
from jax.experimental.pallas import tpu as pltpu


# ----------------------------- Pallas kernels ---------------------------------
def _glu_kernel_f32_out(x_ref, wgu_ref, wd_ref, out_ref):
    """One (seq_tile i, hidden_tile k) step; accumulates straight into out_ref.

    x_ref  : [tm, E]    bf16  activations (resident across the k axis)
    wgu_ref: [2, E, tn] bf16  stacked (gate, up) weight slice -- one DMA stream
    wd_ref : [tn, E]    bf16  down-projection slice
    out_ref: [tm, E]    f32   same block across k -> VMEM-resident accumulator
    """
    k = pl.program_id(1)
    xb = x_ref[...]
    g = jnp.dot(xb, wgu_ref[0], preferred_element_type=jnp.float32)   # [tm, tn]
    u = jnp.dot(xb, wgu_ref[1], preferred_element_type=jnp.float32)   # [tm, tn]
    h = (g * jax.nn.sigmoid(g)) * u                                   # silu(g)*u, f32 VPU/EUP
    partial = jnp.dot(h.astype(jnp.bfloat16), wd_ref[...],
                      preferred_element_type=jnp.float32)             # [tm, E]

    @pl.when(k == 0)
    def _():
        out_ref[...] = partial

    @pl.when(k > 0)
    def _():
        out_ref[...] += partial


def _glu_kernel_lowprec_out(x_ref, wgu_ref, wd_ref, out_ref, acc_ref):
    """Same as above, but with an f32 scratch accumulator for bf16/low-prec outputs."""
    k = pl.program_id(1)
    xb = x_ref[...]
    g = jnp.dot(xb, wgu_ref[0], preferred_element_type=jnp.float32)
    u = jnp.dot(xb, wgu_ref[1], preferred_element_type=jnp.float32)
    h = (g * jax.nn.sigmoid(g)) * u
    partial = jnp.dot(h.astype(jnp.bfloat16), wd_ref[...],
                      preferred_element_type=jnp.float32)

    @pl.when(k == 0)
    def _():
        acc_ref[...] = partial

    @pl.when(k > 0)
    def _():
        acc_ref[...] += partial

    @pl.when(k == pl.num_programs(1) - 1)
    def _():
        out_ref[...] = acc_ref[...].astype(out_ref.dtype)


# ----------------------------- helpers -----------------------------------------
def _round_up(v, m):
    return ((v + m - 1) // m) * m


def _cdiv(a, b):
    return (a + b - 1) // b


def _pick_tile(dim, target, align):
    """Largest multiple of `align` <= target that divides `dim`; if no such
    divisor exists (or dim <= target) return an aligned tile and let the caller
    zero-pad `dim` up to a multiple of it."""
    target = max(align, (target // align) * align)
    if dim <= target:
        return _round_up(dim, align)
    for t in range(target, align - 1, -align):
        if dim % t == 0:
            return t
    return target


def _vmem_capacity_bytes():
    try:
        return int(pltpu.get_tpu_info().vmem_capacity_bytes)
    except Exception:
        return 64 * 1024 * 1024        # conservative fallback: v7x per-TC VMEM


def _vmem_working_set(tm, tn, E, out_bytes, with_scratch):
    bf16, f32 = 2, 4
    ws = 2 * tm * E * bf16             # x block (double-buffered, bf16)
    ws += 2 * 2 * E * tn * bf16        # fused gate+up block (double-buffered)
    ws += 2 * tn * E * bf16            # down-projection block (double-buffered)
    ws += 2 * tm * E * out_bytes       # output block (double-buffered)
    if with_scratch:
        ws += tm * E * f32             # f32 accumulator scratch
    ws += 4 * tm * tn * f32            # g / u / h temporaries + slack
    return ws


# ----------------------------- weight prep (one-time) ---------------------------
def prepare_glu_weights(w_gate, w_up, w_down, dtype=jnp.bfloat16):
    """One-time weight prep (keep the results persistent; do NOT call per step).

    Casts the weights to bf16 and stacks gate+up into one [2, E, I] tensor so the
    kernel streams a single fused weight block per hidden tile and the per-call
    wrapper never re-reads full weights from HBM.
    """
    w_gate_up = jnp.stack([w_gate, w_up], axis=0).astype(dtype)
    return w_gate_up, w_down.astype(dtype)


# ----------------------------- wrapper ------------------------------------------
def gated_linear_unit(x, w_gate_up, w_down, *, seq_tile=256, hid_tile=512):
    """out = (silu(x @ w_gate) * (x @ w_up)) @ w_down, tiled Pallas TPU kernel.

    x         : [..., E]   (output keeps this dtype)
    w_gate_up : [2, E, I]  from prepare_glu_weights (bf16)
    w_down    : [I, E]     from prepare_glu_weights (bf16)
    """
    orig_shape = x.shape
    out_dtype = x.dtype
    E = x.shape[-1]
    I = w_down.shape[0]
    assert w_gate_up.shape == (2, E, I)
    assert w_down.shape == (I, E)

    x2 = x.reshape(-1, E)
    M = x2.shape[0]

    # ---- tile selection: MXU-aligned, VMEM-budget aware ----
    tm_align = 128 if M >= 128 else 16          # >=16 for bf16 sublane packing
    tm = _pick_tile(M, seq_tile, tm_align)
    tn = _pick_tile(I, hid_tile, 128)

    # Keep both v7x TensorCores busy: >= 2 'parallel' sequence tiles when M allows.
    if M >= 2 * 128 and _cdiv(M, tm) < 2:
        tm = max(128, _round_up(_cdiv(M, 2), 128))

    out_bytes = jnp.dtype(out_dtype).itemsize
    with_scratch = out_dtype != jnp.float32
    capacity = _vmem_capacity_bytes()
    budget = capacity - 8 * 1024 * 1024         # leave pipelining/compiler headroom
    while _vmem_working_set(tm, tn, E, out_bytes, with_scratch) > budget:
        if tn > 128:
            tn = max(128, tn // 2)
        elif tm > 16:
            tm = max(16, _round_up(tm // 2, 16))
        else:
            break

    # ---- pad awkward shapes to tile multiples (zero pad is exact for SwiGLU) ----
    M_pad = _round_up(M, tm)
    I_pad = _round_up(I, tn)
    if M_pad != M:
        x2 = jnp.pad(x2, ((0, M_pad - M), (0, 0)))
    if I_pad != I:
        # Per-call weight padding costs an HBM pass; production shapes should keep
        # I a multiple of the hidden tile so this never triggers.
        w_gate_up = jnp.pad(w_gate_up, ((0, 0), (0, 0), (0, I_pad - I)))
        w_down = jnp.pad(w_down, ((0, I_pad - I), (0, 0)))

    # Cast activations to the matmul dtype ONCE at the boundary: bf16 x tile means
    # half the x DMA / VMEM and no per-k in-kernel convert.
    x2 = x2.astype(w_gate_up.dtype)

    grid = (M_pad // tm, I_pad // tn)
    if with_scratch:
        kernel = _glu_kernel_lowprec_out
        scratch_shapes = [pltpu.VMEM((tm, E), jnp.float32)]
    else:
        kernel = _glu_kernel_f32_out
        scratch_shapes = []

    ws = _vmem_working_set(tm, tn, E, out_bytes, with_scratch)
    vmem_limit = int(min(capacity - 4 * 1024 * 1024,
                         max(32 * 1024 * 1024, 2 * ws)))

    out = pl.pallas_call(
        kernel,
        out_shape=jax.ShapeDtypeStruct((M_pad, E), out_dtype),
        grid_spec=pltpu.PrefetchScalarGridSpec(
            num_scalar_prefetch=0,
            grid=grid,
            in_specs=[
                pl.BlockSpec((tm, E), lambda i, k: (i, 0)),        # x: resident over k
                pl.BlockSpec((2, E, tn), lambda i, k: (0, 0, k)),  # fused gate+up slice
                pl.BlockSpec((tn, E), lambda i, k: (k, 0)),        # down-proj slice
            ],
            out_specs=pl.BlockSpec((tm, E), lambda i, k: (i, 0)),  # lane-dense full-E
            scratch_shapes=scratch_shapes,
        ),
        compiler_params=pltpu.CompilerParams(
            dimension_semantics=("parallel", "arbitrary"),
            vmem_limit_bytes=vmem_limit,
        ),
    )(x2, w_gate_up, w_down)

    if M_pad != M:
        out = out[:M]
    return out.reshape(orig_shape)


# ----------------------------- pure-JAX reference -------------------------------
def gated_linear_unit_ref(x, w_gate, w_up, w_down):
    g = x @ w_gate
    u = x @ w_up
    return (jax.nn.silu(g) * u) @ w_down


# ----------------------------- main ---------------------------------------------
if __name__ == "__main__":
    # Small, lane-dense config: batch=2, seq=128, len_embedding=256, hidden_dimension=512.
    B, S, E, I = 2, 128, 256, 512

    key = jax.random.PRNGKey(0)
    kx, kg, ku, kd = jax.random.split(key, 4)

    # Weights stored [in_features, out_features] (transposed vs nn.Linear.weight).
    w_gate = jax.random.normal(kg, (E, I), jnp.float32) / math.sqrt(E)
    w_up = jax.random.normal(ku, (E, I), jnp.float32) / math.sqrt(E)
    w_down = jax.random.normal(kd, (I, E), jnp.float32) / math.sqrt(I)
    x = jax.random.normal(kx, (B, S, E), jnp.float32)

    # One-time weight prep (bf16 cast + gate/up stacking) -- outside the hot path.
    w_gu_bf16, w_down_bf16 = prepare_glu_weights(w_gate, w_up, w_down)

    # Small tiles here so the demo exercises a (2, 2) grid; the defaults
    # (seq_tile=256, hid_tile=512) are the production choice.
    out = gated_linear_unit(x, w_gu_bf16, w_down_bf16, seq_tile=128, hid_tile=256)
    out = jax.block_until_ready(out)

    expected = gated_linear_unit_ref(x, w_gate, w_up, w_down)
    assert out.shape == x.shape
    max_err = float(jnp.max(jnp.abs(out - expected)))
    # Kernel uses bf16 matmul operands with f32 accumulation -> loosened tolerance
    # vs. the all-f32 reference.
    assert jnp.allclose(out, expected, atol=3e-2, rtol=3e-2), (
        f"mismatch vs JAX reference (max abs err={max_err})")

    print("KERNEL_OK")
</pallas_src>

<mosaic_0001>
module attributes {stable_mosaic.version = 11 : i64} {
  func.func @_glu_kernel_f32_out(%arg0: i32, %arg1: i32, %arg2: memref<128x256xbf16, #tpu.memory_space<vmem>>, %arg3: memref<2x256x256xbf16, #tpu.memory_space<vmem>>, %arg4: memref<256x256xbf16, #tpu.memory_space<vmem>>, %arg5: memref<128x256xf32, #tpu.memory_space<vmem>>) attributes {dimension_semantics = [#tpu.dimension_semantics<parallel>, #tpu.dimension_semantics<arbitrary>], iteration_bounds = array<i64: 2, 2>, scalar_prefetch = 0 : i64, scratch_operands = 0 : i64, tpu.core_type = #tpu.core_type<tc>, window_params = [{transform_indices = @transform_0, window_bounds = array<i64: 128, 256>}, {transform_indices = @transform_1, window_bounds = array<i64: 2, 256, 256>}, {transform_indices = @transform_2, window_bounds = array<i64: 256, 256>}, {transform_indices = @transform_3, window_bounds = array<i64: 128, 256>}]} {
    %c0 = arith.constant 0 : index
    %c0_0 = arith.constant 0 : index
    %0 = vector.load %arg2[%c0, %c0_0] : memref<128x256xbf16, #tpu.memory_space<vmem>>, vector<128x256xbf16>
    %c0_1 = arith.constant 0 : index
    %c0_2 = arith.constant 0 : index
    %c0_3 = arith.constant 0 : index
    %1 = vector.load %arg3[%c0_1, %c0_2, %c0_3] : memref<2x256x256xbf16, #tpu.memory_space<vmem>>, vector<1x256x256xbf16>
    %2 = vector.shape_cast %1 : vector<1x256x256xbf16> to vector<256x256xbf16>
    %cst = arith.constant dense<0.000000e+00> : vector<128x256xf32>
    %3 = tpu.matmul %0, %2, %cst {dimension_numbers = #tpu.dot_dimension_numbers<[1], [0], [0], [1], [0, 0, 1, 1], [], []>} : vector<128x256xbf16>, vector<256x256xbf16>, vector<128x256xf32> -> vector<128x256xf32>
    %c1 = arith.constant 1 : index
    %c0_4 = arith.constant 0 : index
    %c0_5 = arith.constant 0 : index
    %4 = vector.load %arg3[%c1, %c0_4, %c0_5] : memref<2x256x256xbf16, #tpu.memory_space<vmem>>, vector<1x256x256xbf16>
    %5 = vector.shape_cast %4 : vector<1x256x256xbf16> to vector<256x256xbf16>
    %cst_6 = arith.constant dense<0.000000e+00> : vector<128x256xf32>
    %6 = tpu.matmul %0, %5, %cst_6 {dimension_numbers = #tpu.dot_dimension_numbers<[1], [0], [0], [1], [0, 0, 1, 1], [], []>} : vector<128x256xbf16>, vector<256x256xbf16>, vector<128x256xf32> -> vector<128x256xf32>
    %7 = arith.negf %3 : vector<128x256xf32>
    %8 = math.exp %7 : vector<128x256xf32>
    %cst_7 = arith.constant 1.000000e+00 : f32
    %9 = vector.broadcast %cst_7 : f32 to vector<128x256xf32>
    %10 = arith.addf %9, %8 : vector<128x256xf32>
    %11 = arith.divf %9, %10 : vector<128x256xf32>
    %12 = arith.mulf %3, %11 : vector<128x256xf32>
    %13 = arith.mulf %12, %6 : vector<128x256xf32>
    %14 = arith.truncf %13 : vector<128x256xf32> to vector<128x256xbf16>
    %c0_8 = arith.constant 0 : index
    %c0_9 = arith.constant 0 : index
    %15 = vector.load %arg4[%c0_8, %c0_9] : memref<256x256xbf16, #tpu.memory_space<vmem>>, vector<256x256xbf16>
    %cst_10 = arith.constant dense<0.000000e+00> : vector<128x256xf32>
    %16 = tpu.matmul %14, %15, %cst_10 {dimension_numbers = #tpu.dot_dimension_numbers<[1], [0], [0], [1], [0, 0, 1, 1], [], []>} : vector<128x256xbf16>, vector<256x256xbf16>, vector<128x256xf32> -> vector<128x256xf32>
    %c0_i32 = arith.constant 0 : i32
    %17 = arith.cmpi eq, %arg1, %c0_i32 : i32
    %18 = arith.extui %17 : i1 to i32
    %c0_i32_11 = arith.constant 0 : i32
    %19 = arith.cmpi ne, %18, %c0_i32_11 : i32
    scf.if %19 {
      %c0_14 = arith.constant 0 : index
      %c0_15 = arith.constant 0 : index
      %23 = vector.load %arg5[%c0_14, %c0_15] : memref<128x256xf32, #tpu.memory_space<vmem>>, vector<128x256xf32>
      tpu.vector_store %arg5[%c0_14, %c0_15], %16 {strides = array<i32>} : memref<128x256xf32, #tpu.memory_space<vmem>>, vector<128x256xf32>,
    } else {
    }
    %c0_i32_12 = arith.constant 0 : i32
    %20 = arith.cmpi sgt, %arg1, %c0_i32_12 : i32
    %21 = arith.extui %20 : i1 to i32
    %c0_i32_13 = arith.constant 0 : i32
    %22 = arith.cmpi ne, %21, %c0_i32_13 : i32
    scf.if %22 {
      %c0_14 = arith.constant 0 : index
      %c0_15 = arith.constant 0 : index
      %23 = vector.load %arg5[%c0_14, %c0_15] : memref<128x256xf32, #tpu.memory_space<vmem>>, vector<128x256xf32>
      %24 = arith.addf %23, %16 : vector<128x256xf32>
      %c0_16 = arith.constant 0 : index
      %c0_17 = arith.constant 0 : index
      %25 = vector.load %arg5[%c0_16, %c0_17] : memref<128x256xf32, #tpu.memory_space<vmem>>, vector<128x256xf32>
      tpu.vector_store %arg5[%c0_16, %c0_17], %24 {strides = array<i32>} : memref<128x256xf32, #tpu.memory_space<vmem>>, vector<128x256xf32>,
    } else {
    }
    return
  }
  func.func @transform_0(%arg0: i32, %arg1: i32) -> (i32, i32) {
    %c0_i32 = arith.constant 0 : i32
    %c0_i32_0 = arith.constant 0 : i32
    return %arg0, %c0_i32 : i32, i32
  }
  func.func @transform_1(%arg0: i32, %arg1: i32) -> (i32, i32, i32) {
    %c0_i32 = arith.constant 0 : i32
    %c0_i32_0 = arith.constant 0 : i32
    %c0_i32_1 = arith.constant 0 : i32
    return %c0_i32, %c0_i32_0, %arg1 : i32, i32, i32
  }
  func.func @transform_2(%arg0: i32, %arg1: i32) -> (i32, i32) {
    %c0_i32 = arith.constant 0 : i32
    %c0_i32_0 = arith.constant 0 : i32
    return %arg1, %c0_i32 : i32, i32
  }
  func.func @transform_3(%arg0: i32, %arg1: i32) -> (i32, i32) {
    %c0_i32 = arith.constant 0 : i32
    %c0_i32_0 = arith.constant 0 : i32
    return %arg0, %c0_i32 : i32, i32
  }
}

</mosaic_0001>

<llo_original>
// kernel: tpu_custom_call.1
$region0: #{tpu_custom_call.1}
  #allocation0 [shape = 'u32[]', space=smem, size = 0x4, offset = 0x4, fixed_abs, tag = 'smem constant byte address 0x4 - core index']
  #allocation1 [shape = 'u32[72,128]{1,0:T(1,128)}', space=vmem, size = 0x9000, scoped, tag = 'internal scratch']
  %s0 = inlined_call_operand.hbm [shape: bf16[256,256], index: 0, kind: input, shape index: {}]
  %s1 = inlined_call_operand.hbm [shape: bf16[2,256,512], index: 1, kind: input, shape index: {}]
  %s2 = inlined_call_operand.hbm [shape: bf16[512,256], index: 2, kind: input, shape index: {}]
  %s3 = inlined_call_operand.hbm [shape: f32[256,256], index: 3, kind: output, shape index: {}]
  %s4 = sld [smem:[#allocation0]]
  $region65: #{tpu_custom_call.1} parent=0
    _
  %s6 = ssub.s32 1, %s4
  %s7 = scalar_select 0, %s6, %s4
  $region1: #{tpu_custom_call.1} parent=0
    #allocation2 [shape = 'u8[131072]{0}', space=vmem, size = 0x20000, scoped, tag = 'input window, operand 0']
    #allocation3 [shape = 's32[2]{0}', space=sflag, size = 0x8, scoped, tag = 'scoped memory for tpu_custom_call.1']
    #allocation4 [shape = 's32[2]{0}', space=sflag, size = 0x8, scoped, tag = 'scoped memory for tpu_custom_call.1']
    #allocation5 [shape = 'u8[524288]{0}', space=vmem, size = 0x80000, scoped, tag = 'input window, operand 1']
    #allocation6 [shape = 's32[2]{0}', space=sflag, size = 0x8, scoped, tag = 'scoped memory for tpu_custom_call.1']
    #allocation7 [shape = 'u8[262144]{0}', space=vmem, size = 0x40000, scoped, tag = 'input window, operand 2']
    #allocation8 [shape = 'u8[262144]{0}', space=vmem, size = 0x40000, scoped, tag = 'output window, operand 0']
    %8 = vsyncpa [#allocation3], 0
    %s9 = scalar_lea.sflag [#allocation3], 1
    %10 = vsyncpa %s9, 0
    %11 = vsyncpa [#allocation6], 0
    %s12 = scalar_lea.sflag [#allocation6], 1
    %13 = vsyncpa %s12, 0
    %14 = vsyncpa [#allocation4], 0
    %s15 = scalar_lea.sflag [#allocation4], 1
    %16 = vsyncpa %s15, 0
    loop: start=0, step=1, limit=6
    $region2: #{tpu_custom_call.1} parent=1 // loop_pre_header
      _
    $region3: #{tpu_custom_call.1} parent=1 // loop_header
      %s18 = sphi 0, %s22
      %p19 = scmp.ge.s32.totalorder %s18, 6
      %s25 = sphi 0, %s37
      %s26 = sphi 0, %s33
      %s27 = sphi 0, %s25
      %s28 = sphi 0, %s26
      %s29 = sphi 0, %s27
      %s30 = sphi 0, %s28
      %s40 = sphi 0, %s42
      %s43 = sphi 0, %s40
      %s44 = sphi 0, %s43
      %s60 = sphi 0, %s44
      %s66 = sphi 0, %s68
      %s69 = sphi 0, %s66
      %s70 = sphi 0, %s69
      %s86 = sphi 0, %s70
      %s92 = sphi 0, %s94
      %s95 = sphi 0, %s92
      %s96 = sphi 0, %s95
      %s112 = sphi 0, %s96
      %s118 = sphi 0, %s120
      %s121 = sphi 0, %s118
      %s122 = sphi 0, %s121
      %s138 = sphi 0, %s122
    $region4: #{tpu_custom_call.1} parent=1 // loop_header_branch
      %21 = sbr.rel (%p19) target = $region8
    $region5: #{tpu_custom_call.1} parent=1 // loop_body
      %s23 = ssub.s32 %s18, 1
      %s24 = ssub.s32 %s18, 2
      %s31 = sadd.s32 1, %s26
      %p32 = scmp.ge.s32.totalorder %s31, 2
      %s33 = scalar_select %p32, 0, %s31
      %s34 = sadd.s32 1, %s25
      %s35 = scalar_select %p32, %s34, %s25
      %p36 = scmp.ge.s32.totalorder %s35, 2
      %s37 = scalar_select %p36, 0, %s35
      %s38 = ssub.s32 %s25, %s37
      %p39 = scmp.eq.s32.totalorder %s38, 0
      %s41 = sadd.s32 %s40, 1
      %s42 = scalar_select %p39, %s40, %s41
      %p45 = pneg %p39
      %p46 = scmp.eq.s32.totalorder %s18, 3
      %p47 = por %p45, %p46
      %p48 = scmp.ne.s32.totalorder %s40, %s43
      %p49 = scmp.eq.s32.totalorder %s18, 0
      %p50 = por %p48, %p49
      %p51 = scmp.ne.s32.totalorder %s40, %s43
      %p52 = scmp.eq.s32.totalorder %s23, 3
      %p53 = por %p51, %p52
      %p54 = scmp.ne.s32.totalorder %s43, %s44
      %p55 = scmp.eq.s32.totalorder %s23, 0
      %p56 = por %p54, %p55
      %p57 = scmp.ne.s32.totalorder %s43, %s44
      %p58 = scmp.eq.s32.totalorder %s24, 3
      %p59 = por %p57, %p58
      %p61 = scmp.ne.s32.totalorder %s44, %s60
      %p62 = scmp.eq.s32.totalorder %s24, 0
      %p63 = por %p61, %p62
      %s64 = ssub.s32 %s26, %s33
      %p65 = scmp.eq.s32.totalorder %s64, 0
      %s67 = sadd.s32 %s66, 1
      %s68 = scalar_select %p65, %s66, %s67
      %p71 = pneg %p65
      %p72 = scmp.eq.s32.totalorder %s18, 3
      %p73 = por %p71, %p72
      %p74 = scmp.ne.s32.totalorder %s66, %s69
      %p75 = scmp.eq.s32.totalorder %s18, 0
      %p76 = por %p74, %p75
      %p77 = scmp.ne.s32.totalorder %s66, %s69
      %p78 = scmp.eq.s32.totalorder %s23, 3
      %p79 = por %p77, %p78
      %p80 = scmp.ne.s32.totalorder %s69, %s70
      %p81 = scmp.eq.s32.totalorder %s23, 0
      %p82 = por %p80, %p81
      %p83 = scmp.ne.s32.totalorder %s69, %s70
      %p84 = scmp.eq.s32.totalorder %s24, 3
      %p85 = por %p83, %p84
      %p87 = scmp.ne.s32.totalorder %s70, %s86
      %p88 = scmp.eq.s32.totalorder %s24, 0
      %p89 = por %p87, %p88
      %s90 = ssub.s32 %s26, %s33
      %p91 = scmp.eq.s32.totalorder %s90, 0
      %s93 = sadd.s32 %s92, 1
      %s94 = scalar_select %p91, %s92, %s93
      %p97 = pneg %p91
      %p98 = scmp.eq.s32.totalorder %s18, 3
      %p99 = por %p97, %p98
      %p100 = scmp.ne.s32.totalorder %s92, %s95
      %p101 = scmp.eq.s32.totalorder %s18, 0
      %p102 = por %p100, %p101
      %p103 = scmp.ne.s32.totalorder %s92, %s95
      %p104 = scmp.eq.s32.totalorder %s23, 3
      %p105 = por %p103, %p104
      %p106 = scmp.ne.s32.totalorder %s95, %s96
      %p107 = scmp.eq.s32.totalorder %s23, 0
      %p108 = por %p106, %p107
      %p109 = scmp.ne.s32.totalorder %s95, %s96
      %p110 = scmp.eq.s32.totalorder %s24, 3
      %p111 = por %p109, %p110
      %p113 = scmp.ne.s32.totalorder %s96, %s112
      %p114 = scmp.eq.s32.totalorder %s24, 0
      %p115 = por %p113, %p114
      %s116 = ssub.s32 %s25, %s37
      %p117 = scmp.eq.s32.totalorder %s116, 0
      %s119 = sadd.s32 %s118, 1
      %s120 = scalar_select %p117, %s118, %s119
      %p123 = pneg %p117
      %p124 = scmp.eq.s32.totalorder %s18, 3
      %p125 = por %p123, %p124
      %p126 = scmp.ne.s32.totalorder %s118, %s121
      %p127 = scmp.eq.s32.totalorder %s18, 0
      %p128 = por %p126, %p127
      %p129 = scmp.ne.s32.totalorder %s118, %s121
      %p130 = scmp.eq.s32.totalorder %s23, 3
      %p131 = por %p129, %p130
      %p132 = scmp.ne.s32.totalorder %s121, %s122
      %p133 = scmp.eq.s32.totalorder %s23, 0
      %p134 = por %p132, %p133
      %p135 = scmp.ne.s32.totalorder %s121, %s122
      %p136 = scmp.eq.s32.totalorder %s24, 3
      %p137 = por %p135, %p136
      %p139 = scmp.ne.s32.totalorder %s122, %s138
      %p140 = scmp.eq.s32.totalorder %s24, 0
      %p141 = por %p139, %p140
      %p142 = scmp.le.s32.totalorder 1, %s18
      %p143 = scmp.lt.s32.totalorder %s18, 5
      %p144 = pnand %p142, %p143
      %p145 = pneg %p144
      // Predicated region
      $region9: #{tpu_custom_call.1} parent=5 // pred_check
        _
      $region10: #{tpu_custom_call.1} parent=5 // pred_check_branch
        %147 = sbr.rel (%p144) target = $region12
      $region11: #{tpu_custom_call.1} parent=5 // pred_region
        %s148 = ssub.s32 %s18, 1
      $region12: #{tpu_custom_call.1} parent=5 // pred_fallthru
        _
      %p149 = scmp.lt.s32.totalorder %s18, 4
      // Predicated region
      $region13: #{tpu_custom_call.1} parent=5 // pred_check
        %p150 = pneg %p149
      $region14: #{tpu_custom_call.1} parent=5 // pred_check_branch
        %152 = sbr.rel (%p150) target = $region16
      $region15: #{tpu_custom_call.1} parent=5 // pred_region
        // Predicated region
        $region17: #{tpu_custom_call.1} parent=15 // pred_check
          %p153 = pneg %p50
        $region18: #{tpu_custom_call.1} parent=15 // pred_check_branch
          %155 = sbr.rel (%p153) target = $region20
        $region19: #{tpu_custom_call.1} parent=15 // pred_region
          %s156 = sand.u32 %s40, 1
          %s157 = scalar_lea.sflag [#allocation3], %s156
          %s158 = sand.u32 %s40, 1
          %s159 = smul.addr %s158, 128
          %s160 = scalar_lea.vmem [#allocation2], %s159
          %s161 = smul.u32 16, %s25
          %163 = vsyncadd %s157, 0
          %s164 = smul.addr %s161, 2
          %s165 = smul.addr %s164, 4
          %s166 = scalar_lea.hbm %s0, %s165
          %s167 = sshll.u32 %s166, 4
          %s168 = int_to_ptr.hbm [resolvable:$true] %s167
          %s169 = sshll.u32 %s160, 4
          %s170 = int_to_ptr.vmem [resolvable:$true] %s169
          %175 = dma.hbm_to_vmem [thread:$0]  %s168, 2048, %s170, %s157, 128, 128, 8
        $region20: #{tpu_custom_call.1} parent=15 // pred_fallthru
          _
        // Predicated region
        $region21: #{tpu_custom_call.1} parent=15 // pred_check
          %p176 = pneg %p76
        $region22: #{tpu_custom_call.1} parent=15 // pred_check_branch
          %178 = sbr.rel (%p176) target = $region24
        $region23: #{tpu_custom_call.1} parent=15 // pred_region
          %s179 = sand.u32 %s18, 1
          %s180 = scalar_lea.sflag [#allocation6], %s179
          %s181 = sand.u32 %s66, 1
          %s182 = smul.addr %s181, 512
          %s183 = scalar_lea.vmem [#allocation5], %s182
          %s184 = smul.u32 2, %s26
          %186 = vsyncadd %s180, 0
          %s187 = smul.addr %s184, 4
          %s188 = scalar_lea.hbm %s1, %s187
          %s189 = sshll.u32 %s188, 4
          %s190 = int_to_ptr.hbm [resolvable:$true] %s189
          %s191 = sshll.u32 %s183, 4
          %s192 = int_to_ptr.vmem [resolvable:$true] %s191
          %197 = dma.hbm_to_vmem [thread:$0]  %s190, 8192, %s192, %s180, 256, 128, 8
        $region24: #{tpu_custom_call.1} parent=15 // pred_fallthru
          _
        // Predicated region
        $region25: #{tpu_custom_call.1} parent=15 // pred_check
          %p198 = pneg %p102
        $region26: #{tpu_custom_call.1} parent=15 // pred_check_branch
          %200 = sbr.rel (%p198) target = $region28
        $region27: #{tpu_custom_call.1} parent=15 // pred_region
          %s201 = sand.u32 %s18, 1
          %s202 = scalar_lea.sflag [#allocation6], %s201
          %s203 = sand.u32 %s92, 1
          %s204 = smul.addr %s203, 256
          %s205 = scalar_lea.vmem [#allocation7], %s204
          %s206 = smul.u32 32, %s26
          %208 = vsyncadd %s202, 0
          %s209 = smul.addr %s206, 2
          %s210 = smul.addr %s209, 4
          %s211 = scalar_lea.hbm %s2, %s210
          %s212 = sshll.u32 %s211, 4
          %s213 = int_to_ptr.hbm [resolvable:$true] %s212
          %s214 = sshll.u32 %s205, 4
          %s215 = int_to_ptr.vmem [resolvable:$true] %s214
          %220 = dma.hbm_to_vmem [thread:$0]  %s213, 4096, %s215, %s202, 128, 128, 8
        $region28: #{tpu_custom_call.1} parent=15 // pred_fallthru
          _
      $region16: #{tpu_custom_call.1} parent=5 // pred_fallthru
        _
      %p221 = scmp.le.s32.totalorder 1, %s18
      %p222 = scmp.lt.s32.totalorder %s18, 5
      %p223 = pnand %p221, %p222
      %p224 = pneg %p223
      // Predicated region
      $region29: #{tpu_custom_call.1} parent=5 // pred_check
        _
      $region30: #{tpu_custom_call.1} parent=5 // pred_check_branch
        %226 = sbr.rel (%p223) target = $region32
      $region31: #{tpu_custom_call.1} parent=5 // pred_region
        %s227 = ssub.s32 %s18, 1
        %s228 = sand.u32 %s43, 1
        %s229 = scalar_lea.sflag [#allocation3], %s228
        %s230 = sand.u32 %s43, 1
        %s231 = smul.addr %s230, 128
        %s232 = scalar_lea.vmem [#allocation2], %s231
        // Predicated region
        $region33: #{tpu_custom_call.1} parent=31 // pred_check
          %p233 = pneg %p56
        $region34: #{tpu_custom_call.1} parent=31 // pred_check_branch
          %235 = sbr.rel (%p233) target = $region36
        $region35: #{tpu_custom_call.1} parent=31 // pred_region
          %237 = dma.done %s229, 2048
        $region36: #{tpu_custom_call.1} parent=31 // pred_fallthru
          _
        %s238 = sand.u32 %s23, 1
        %s239 = scalar_lea.sflag [#allocation6], %s238
        %s240 = sand.u32 %s69, 1
        %s241 = smul.addr %s240, 512
        %s242 = scalar_lea.vmem [#allocation5], %s241
        // Predicated region
        $region37: #{tpu_custom_call.1} parent=31 // pred_check
          %p243 = pneg %p82
        $region38: #{tpu_custom_call.1} parent=31 // pred_check_branch
          %245 = sbr.rel (%p243) target = $region40
        $region39: #{tpu_custom_call.1} parent=31 // pred_region
          %247 = dma.done %s239, 8192
        $region40: #{tpu_custom_call.1} parent=31 // pred_fallthru
          _
        %s248 = sand.u32 %s23, 1
        %s249 = scalar_lea.sflag [#allocation6], %s248
        %s250 = sand.u32 %s95, 1
        %s251 = smul.addr %s250, 256
        %s252 = scalar_lea.vmem [#allocation7], %s251
        // Predicated region
        $region41: #{tpu_custom_call.1} parent=31 // pred_check
          %p253 = pneg %p108
        $region42: #{tpu_custom_call.1} parent=31 // pred_check_branch
          %255 = sbr.rel (%p253) target = $region44
        $region43: #{tpu_custom_call.1} parent=31 // pred_region
          %257 = dma.done %s249, 4096
        $region44: #{tpu_custom_call.1} parent=31 // pred_fallthru
          _
        %s258 = sand.u32 %s43, 1
        %s259 = scalar_lea.sflag [#allocation3], %s258
        %s260 = sand.u32 %s43, 1
        %s261 = smul.addr %s260, 128
        %s262 = scalar_lea.vmem [#allocation2], %s261
        %p263 = pneg %p56
        %p264 = pneg %p53
        %s265 = sand.u32 %s23, 1
        %s266 = scalar_lea.sflag [#allocation6], %s265
        %s267 = sand.u32 %s69, 1
        %s268 = smul.addr %s267, 512
        %s269 = scalar_lea.vmem [#allocation5], %s268
        %p270 = pneg %p82
        %p271 = pneg %p79
        %s272 = sand.u32 %s23, 1
        %s273 = scalar_lea.sflag [#allocation6], %s272
        %s274 = sand.u32 %s95, 1
        %s275 = smul.addr %s274, 256
        %s276 = scalar_lea.vmem [#allocation7], %s275
        %p277 = pneg %p108
        %p278 = pneg %p105
        %p279 = pneg %p134
        %p280 = pneg %p131
        %s281 = sand.u32 %s121, 1
        %s282 = scalar_lea.sflag [#allocation4], %s281
        %s283 = sand.u32 %s121, 1
        %s284 = smul.addr %s283, 256
        %s285 = scalar_lea.vmem [#allocation8], %s284
        %s286 = smul.u32 16, %s27
        %s287 = smul.u32 2, %s28
        %s288 = smul.u32 32, %s28
        %s289 = smul.u32 16, %s27
        %v290 = vld [vmem:[%s232] sm:$0xff]
        %v291 = vld [vmem:[%s232 + $0x8] sm:$0xff]
        %v292 = vld [vmem:[%s232 + $0x10] sm:$0xff]
        %v293 = vld [vmem:[%s232 + $0x18] sm:$0xff]
        %v294 = vld [vmem:[%s232 + $0x20] sm:$0xff]
        %v295 = vld [vmem:[%s232 + $0x28] sm:$0xff]
        %v296 = vld [vmem:[%s232 + $0x30] sm:$0xff]
        %v297 = vld [vmem:[%s232 + $0x38] sm:$0xff]
        %v298 = vld [vmem:[%s232 + $0x40] sm:$0xff]
        %v299 = vld [vmem:[%s232 + $0x48] sm:$0xff]
        %v300 = vld [vmem:[%s232 + $0x50] sm:$0xff]
        %v301 = vld [vmem:[%s232 + $0x58] sm:$0xff]
        %v302 = vld [vmem:[%s232 + $0x60] sm:$0xff]
        %v303 = vld [vmem:[%s232 + $0x68] sm:$0xff]
        %v304 = vld [vmem:[%s232 + $0x70] sm:$0xff]
        %v305 = vld [vmem:[%s232 + $0x78] sm:$0xff]
        %v306 = vld [vmem:[%s242] sm:$0xff]
        %v307 = vld [vmem:[%s242 + $0x8] sm:$0xff]
        %v308 = vld [vmem:[%s242 + $0x10] sm:$0xff]
        %v309 = vld [vmem:[%s242 + $0x18] sm:$0xff]
        %v310 = vld [vmem:[%s242 + $0x20] sm:$0xff]
        %v311 = vld [vmem:[%s242 + $0x28] sm:$0xff]
        %v312 = vld [vmem:[%s242 + $0x30] sm:$0xff]
        %v313 = vld [vmem:[%s242 + $0x38] sm:$0xff]
        %v314 = vld [vmem:[%s242 + $0x40] sm:$0xff]
        %v315 = vld [vmem:[%s242 + $0x48] sm:$0xff]
        %v316 = vld [vmem:[%s242 + $0x50] sm:$0xff]
        %v317 = vld [vmem:[%s242 + $0x58] sm:$0xff]
        %v318 = vld [vmem:[%s242 + $0x60] sm:$0xff]
        %v319 = vld [vmem:[%s242 + $0x68] sm:$0xff]
        %v320 = vld [vmem:[%s242 + $0x70] sm:$0xff]
        %v321 = vld [vmem:[%s242 + $0x78] sm:$0xff]
        %v322 = vld [vmem:[%s242 + $0x80] sm:$0xff]
        %v323 = vld [vmem:[%s242 + $0x88] sm:$0xff]
        %v324 = vld [vmem:[%s242 + $0x90] sm:$0xff]
        %v325 = vld [vmem:[%s242 + $0x98] sm:$0xff]
        %v326 = vld [vmem:[%s242 + $0xa0] sm:$0xff]
        %v327 = vld [vmem:[%s242 + $0xa8] sm:$0xff]
        %v328 = vld [vmem:[%s242 + $0xb0] sm:$0xff]
        %v329 = vld [vmem:[%s242 + $0xb8] sm:$0xff]
        %v330 = vld [vmem:[%s242 + $0xc0] sm:$0xff]
        %v331 = vld [vmem:[%s242 + $0xc8] sm:$0xff]
        %v332 = vld [vmem:[%s242 + $0xd0] sm:$0xff]
        %v333 = vld [vmem:[%s242 + $0xd8] sm:$0xff]
        %v334 = vld [vmem:[%s242 + $0xe0] sm:$0xff]
        %v335 = vld [vmem:[%s242 + $0xe8] sm:$0xff]
        %v336 = vld [vmem:[%s242 + $0xf0] sm:$0xff]
        %v337 = vld [vmem:[%s242 + $0xf8] sm:$0xff]
        %v354 = vunpack.c.l.b16 %v290
        %v355 = vunpack.c.h.b16 %v290
        %v356 = vunpack.c.l.b16 %v291
        %v357 = vunpack.c.h.b16 %v291
        %v358 = vunpack.c.l.b16 %v292
        %v359 = vunpack.c.h.b16 %v292
        %v360 = vunpack.c.l.b16 %v293
        %v361 = vunpack.c.h.b16 %v293
        %v362 = vunpack.c.l.b16 %v294
        %v363 = vunpack.c.h.b16 %v294
        %v364 = vunpack.c.l.b16 %v295
        %v365 = vunpack.c.h.b16 %v295
        %v366 = vunpack.c.l.b16 %v296
        %v367 = vunpack.c.h.b16 %v296
        %v368 = vunpack.c.l.b16 %v297
        %v369 = vunpack.c.h.b16 %v297
        %v370 = vunpack.c.l.b16 %v298
        %v371 = vunpack.c.h.b16 %v298
        %v372 = vunpack.c.l.b16 %v299
        %v373 = vunpack.c.h.b16 %v299
        %v374 = vunpack.c.l.b16 %v300
        %v375 = vunpack.c.h.b16 %v300
        %v376 = vunpack.c.l.b16 %v301
        %v377 = vunpack.c.h.b16 %v301
        %v378 = vunpack.c.l.b16 %v302
        %v379 = vunpack.c.h.b16 %v302
        %v380 = vunpack.c.l.b16 %v303
        %v381 = vunpack.c.h.b16 %v303
        %v382 = vunpack.c.l.b16 %v304
        %v383 = vunpack.c.h.b16 %v304
        %v384 = vunpack.c.l.b16 %v305
        %v385 = vunpack.c.h.b16 %v305
        %v386 = vpack.c.b16 %v356, %v354
        %v387 = vpack.c.b16 %v357, %v355
        %v388 = vpack.c.b16 %v360, %v358
        %v389 = vpack.c.b16 %v361, %v359
        %v390 = vpack.c.b16 %v364, %v362
        %v391 = vpack.c.b16 %v365, %v363
        %v392 = vpack.c.b16 %v368, %v366
        %v393 = vpack.c.b16 %v369, %v367
        %v394 = vpack.c.b16 %v372, %v370
        %v395 = vpack.c.b16 %v373, %v371
        %v396 = vpack.c.b16 %v376, %v374
        %v397 = vpack.c.b16 %v377, %v375
        %v398 = vpack.c.b16 %v380, %v378
        %v399 = vpack.c.b16 %v381, %v379
        %v400 = vpack.c.b16 %v384, %v382
        %v401 = vpack.c.b16 %v385, %v383
        %v450 = vunpack.c.l.b16 %v306
        %v451 = vunpack.c.h.b16 %v306
        %v452 = vunpack.c.l.b16 %v307
        %v453 = vunpack.c.h.b16 %v307
        %v454 = vunpack.c.l.b16 %v308
        %v455 = vunpack.c.h.b16 %v308
        %v456 = vunpack.c.l.b16 %v309
        %v457 = vunpack.c.h.b16 %v309
        %v458 = vunpack.c.l.b16 %v310
        %v459 = vunpack.c.h.b16 %v310
        %v460 = vunpack.c.l.b16 %v311
        %v461 = vunpack.c.h.b16 %v311
        %v462 = vunpack.c.l.b16 %v312
        %v463 = vunpack.c.h.b16 %v312
        %v464 = vunpack.c.l.b16 %v313
        %v465 = vunpack.c.h.b16 %v313
        %v466 = vunpack.c.l.b16 %v314
        %v467 = vunpack.c.h.b16 %v314
        %v468 = vunpack.c.l.b16 %v315
        %v469 = vunpack.c.h.b16 %v315
        %v470 = vunpack.c.l.b16 %v316
        %v471 = vunpack.c.h.b16 %v316
        %v472 = vunpack.c.l.b16 %v317
        %v473 = vunpack.c.h.b16 %v317
        %v474 = vunpack.c.l.b16 %v318
        %v475 = vunpack.c.h.b16 %v318
        %v476 = vunpack.c.l.b16 %v319
        %v477 = vunpack.c.h.b16 %v319
        %v478 = vunpack.c.l.b16 %v320
        %v479 = vunpack.c.h.b16 %v320
        %v480 = vunpack.c.l.b16 %v321
        %v481 = vunpack.c.h.b16 %v321
        %v482 = vunpack.c.l.b16 %v322
        %v483 = vunpack.c.h.b16 %v322
        %v484 = vunpack.c.l.b16 %v323
        %v485 = vunpack.c.h.b16 %v323
        %v486 = vunpack.c.l.b16 %v324
        %v487 = vunpack.c.h.b16 %v324
        %v488 = vunpack.c.l.b16 %v325
        %v489 = vunpack.c.h.b16 %v325
        %v490 = vunpack.c.l.b16 %v326
        %v491 = vunpack.c.h.b16 %v326
        %v492 = vunpack.c.l.b16 %v327
        %v493 = vunpack.c.h.b16 %v327
        %v494 = vunpack.c.l.b16 %v328
        %v495 = vunpack.c.h.b16 %v328
        %v496 = vunpack.c.l.b16 %v329
        %v497 = vunpack.c.h.b16 %v329
        %v498 = vunpack.c.l.b16 %v330
        %v499 = vunpack.c.h.b16 %v330
        %v500 = vunpack.c.l.b16 %v331
        %v501 = vunpack.c.h.b16 %v331
        %v502 = vunpack.c.l.b16 %v332
        %v503 = vunpack.c.h.b16 %v332
        %v504 = vunpack.c.l.b16 %v333
        %v505 = vunpack.c.h.b16 %v333
        %v506 = vunpack.c.l.b16 %v334
        %v507 = vunpack.c.h.b16 %v334
        %v508 = vunpack.c.l.b16 %v335
        %v509 = vunpack.c.h.b16 %v335
        %v510 = vunpack.c.l.b16 %v336
        %v511 = vunpack.c.h.b16 %v336
        %v512 = vunpack.c.l.b16 %v337
        %v513 = vunpack.c.h.b16 %v337
        %v514 = vpack.c.b16 %v452, %v450
        %v515 = vpack.c.b16 %v453, %v451
        %v516 = vpack.c.b16 %v456, %v454
        %v517 = vpack.c.b16 %v457, %v455
        %v518 = vpack.c.b16 %v460, %v458
        %v519 = vpack.c.b16 %v461, %v459
        %v520 = vpack.c.b16 %v464, %v462
        %v521 = vpack.c.b16 %v465, %v463
        %v522 = vpack.c.b16 %v468, %v466
        %v523 = vpack.c.b16 %v469, %v467
        %v524 = vpack.c.b16 %v472, %v470
        %v525 = vpack.c.b16 %v473, %v471
        %v526 = vpack.c.b16 %v476, %v474
        %v527 = vpack.c.b16 %v477, %v475
        %v528 = vpack.c.b16 %v480, %v478
        %v529 = vpack.c.b16 %v481, %v479
        %v530 = vpack.c.b16 %v484, %v482
        %v531 = vpack.c.b16 %v485, %v483
        %v532 = vpack.c.b16 %v488, %v486
        %v533 = vpack.c.b16 %v489, %v487
        %v534 = vpack.c.b16 %v492, %v490
        %v535 = vpack.c.b16 %v493, %v491
        %v536 = vpack.c.b16 %v496, %v494
        %v537 = vpack.c.b16 %v497, %v495
        %v538 = vpack.c.b16 %v500, %v498
        %v539 = vpack.c.b16 %v501, %v499
        %v540 = vpack.c.b16 %v504, %v502
        %v541 = vpack.c.b16 %v505, %v503
        %v542 = vpack.c.b16 %v508, %v506
        %v543 = vpack.c.b16 %v509, %v507
        %v544 = vpack.c.b16 %v512, %v510
        %v545 = vpack.c.b16 %v513, %v511
        %578 = vmatpush.bf16.msra.mxu0 %v528
        %579 = vmatpush.bf16.msra.mxu0 %v526
        %580 = vmatpush.bf16.msra.mxu0 %v524
        %581 = vmatpush.bf16.msra.mxu0 %v522
        %582 = vmatpush.bf16.msra.mxu0 %v520
        %583 = vmatpush.bf16.msra.mxu0 %v518
        %584 = vmatpush.bf16.msra.mxu0 %v516
        %585 = vmatpush.bf16.msra.mxu0 %v514
        %586 = vmatmul.bf16.gmra.mxu0 %v386
        %v587 = vpop.f32.mrf.mxu0
        %v588 = vadd.f32 0.0, %v587
        %v589 = vpop.f32.mrf.mxu0
        %v590 = vadd.f32 0.0, %v589
        %591 = vmatmul.bf16.gmra.mxu0 %v388
        %v592 = vpop.f32.mrf.mxu0
        %v593 = vadd.f32 0.0, %v592
        %v594 = vpop.f32.mrf.mxu0
        %v595 = vadd.f32 0.0, %v594
        %596 = vmatmul.bf16.gmra.mxu0 %v390
        %v597 = vpop.f32.mrf.mxu0
        %v598 = vadd.f32 0.0, %v597
        %v599 = vpop.f32.mrf.mxu0
        %v600 = vadd.f32 0.0, %v599
        %601 = vmatmul.bf16.gmra.mxu0 %v392
        %v602 = vpop.f32.mrf.mxu0
        %v603 = vadd.f32 0.0, %v602
        %v604 = vpop.f32.mrf.mxu0
        %v605 = vadd.f32 0.0, %v604
        %606 = vmatmul.bf16.gmra.mxu0 %v394
        %v607 = vpop.f32.mrf.mxu0
        %v608 = vadd.f32 0.0, %v607
        %v609 = vpop.f32.mrf.mxu0
        %v610 = vadd.f32 0.0, %v609
        %611 = vmatmul.bf16.gmra.mxu0 %v396
        %v612 = vpop.f32.mrf.mxu0
        %v613 = vadd.f32 0.0, %v612
        %v614 = vpop.f32.mrf.mxu0
        %v615 = vadd.f32 0.0, %v614
        %616 = vmatmul.bf16.gmra.mxu0 %v398
        %v617 = vpop.f32.mrf.mxu0
        %v618 = vadd.f32 0.0, %v617
        %v619 = vpop.f32.mrf.mxu0
        %v620 = vadd.f32 0.0, %v619
        %621 = vmatmul.bf16.gmra.mxu0 %v400
        %v622 = vpop.f32.mrf.mxu0
        %v623 = vadd.f32 0.0, %v622
        %v624 = vpop.f32.mrf.mxu0
        %v625 = vadd.f32 0.0, %v624
        %626 = vdwg.mxu0
        %627 = vmatpush.bf16.msra.mxu0 %v544
        %628 = vmatpush.bf16.msra.mxu0 %v542
        %629 = vmatpush.bf16.msra.mxu0 %v540
        %630 = vmatpush.bf16.msra.mxu0 %v538
        %631 = vmatpush.bf16.msra.mxu0 %v536
        %632 = vmatpush.bf16.msra.mxu0 %v534
        %633 = vmatpush.bf16.msra.mxu0 %v532
        %634 = vmatpush.bf16.msra.mxu0 %v530
        %635 = vmatmul.bf16.gmra.mxu0 %v387
        %v636 = vpop.f32.mrf.mxu0
        %v637 = vadd.f32 %v588, %v636
        %v638 = vpop.f32.mrf.mxu0
        %v639 = vadd.f32 %v590, %v638
        %640 = vmatmul.bf16.gmra.mxu0 %v389
        %v641 = vpop.f32.mrf.mxu0
        %v642 = vadd.f32 %v593, %v641
        %v643 = vpop.f32.mrf.mxu0
        %v644 = vadd.f32 %v595, %v643
        %645 = vmatmul.bf16.gmra.mxu0 %v391
        %v646 = vpop.f32.mrf.mxu0
        %v647 = vadd.f32 %v598, %v646
        %v648 = vpop.f32.mrf.mxu0
        %v649 = vadd.f32 %v600, %v648
        %650 = vmatmul.bf16.gmra.mxu0 %v393
        %v651 = vpop.f32.mrf.mxu0
        %v652 = vadd.f32 %v603, %v651
        %v653 = vpop.f32.mrf.mxu0
        %v654 = vadd.f32 %v605, %v653
        %655 = vmatmul.bf16.gmra.mxu0 %v395
        %v656 = vpop.f32.mrf.mxu0
        %v657 = vadd.f32 %v608, %v656
        %v658 = vpop.f32.mrf.mxu0
        %v659 = vadd.f32 %v610, %v658
        %660 = vmatmul.bf16.gmra.mxu0 %v397
        %v661 = vpop.f32.mrf.mxu0
        %v662 = vadd.f32 %v613, %v661
        %v663 = vpop.f32.mrf.mxu0
        %v664 = vadd.f32 %v615, %v663
        %665 = vmatmul.bf16.gmra.mxu0 %v399
        %v666 = vpop.f32.mrf.mxu0
        %v667 = vadd.f32 %v618, %v666
        %v668 = vpop.f32.mrf.mxu0
        %v669 = vadd.f32 %v620, %v668
        %670 = vmatmul.bf16.gmra.mxu0 %v401
        %v671 = vpop.f32.mrf.mxu0
        %v672 = vadd.f32 %v623, %v671
        %v673 = vpop.f32.mrf.mxu0
        %v674 = vadd.f32 %v625, %v673
        %675 = vdwg.mxu0
        %676 = vmatpush.bf16.msra.mxu0 %v529
        %677 = vmatpush.bf16.msra.mxu0 %v527
        %678 = vmatpush.bf16.msra.mxu0 %v525
        %679 = vmatpush.bf16.msra.mxu0 %v523
        %680 = vmatpush.bf16.msra.mxu0 %v521
        %681 = vmatpush.bf16.msra.mxu0 %v519
        %682 = vmatpush.bf16.msra.mxu0 %v517
        %683 = vmatpush.bf16.msra.mxu0 %v515
        %684 = vmatmul.bf16.gmra.mxu0 %v386
        %v685 = vpop.f32.mrf.mxu0
        %v686 = vadd.f32 0.0, %v685
        %v687 = vpop.f32.mrf.mxu0
        %v688 = vadd.f32 0.0, %v687
        %689 = vmatmul.bf16.gmra.mxu0 %v388
        %v690 = vpop.f32.mrf.mxu0
        %v691 = vadd.f32 0.0, %v690
        %v692 = vpop.f32.mrf.mxu0
        %v693 = vadd.f32 0.0, %v692
        %694 = vmatmul.bf16.gmra.mxu0 %v390
        %v695 = vpop.f32.mrf.mxu0
        %v696 = vadd.f32 0.0, %v695
        %v697 = vpop.f32.mrf.mxu0
        %v698 = vadd.f32 0.0, %v697
        %699 = vmatmul.bf16.gmra.mxu0 %v392
        %v700 = vpop.f32.mrf.mxu0
        %v701 = vadd.f32 0.0, %v700
        %v702 = vpop.f32.mrf.mxu0
        %v703 = vadd.f32 0.0, %v702
        %704 = vmatmul.bf16.gmra.mxu0 %v394
        %v705 = vpop.f32.mrf.mxu0
        %v706 = vadd.f32 0.0, %v705
        %v707 = vpop.f32.mrf.mxu0
        %v708 = vadd.f32 0.0, %v707
        %709 = vmatmul.bf16.gmra.mxu0 %v396
        %v710 = vpop.f32.mrf.mxu0
        %v711 = vadd.f32 0.0, %v710
        %v712 = vpop.f32.mrf.mxu0
        %v713 = vadd.f32 0.0, %v712
        %714 = vmatmul.bf16.gmra.mxu0 %v398
        %v715 = vpop.f32.mrf.mxu0
        %v716 = vadd.f32 0.0, %v715
        %v717 = vpop.f32.mrf.mxu0
        %v718 = vadd.f32 0.0, %v717
        %719 = vmatmul.bf16.gmra.mxu0 %v400
        %v720 = vpop.f32.mrf.mxu0
        %v721 = vadd.f32 0.0, %v720
        %v722 = vpop.f32.mrf.mxu0
        %v723 = vadd.f32 0.0, %v722
        %724 = vdwg.mxu0
        %725 = vmatpush.bf16.msra.mxu0 %v545
        %726 = vmatpush.bf16.msra.mxu0 %v543
        %727 = vmatpush.bf16.msra.mxu0 %v541
        %728 = vmatpush.bf16.msra.mxu0 %v539
        %729 = vmatpush.bf16.msra.mxu0 %v537
        %730 = vmatpush.bf16.msra.mxu0 %v535
        %731 = vmatpush.bf16.msra.mxu0 %v533
        %732 = vmatpush.bf16.msra.mxu0 %v531
        %733 = vmatmul.bf16.gmra.mxu0 %v387
        %v734 = vpop.f32.mrf.mxu0
        %v735 = vadd.f32 %v686, %v734
        %v736 = vpop.f32.mrf.mxu0
        %v737 = vadd.f32 %v688, %v736
        %738 = vmatmul.bf16.gmra.mxu0 %v389
        %v739 = vpop.f32.mrf.mxu0
        %v740 = vadd.f32 %v691, %v739
        %v741 = vpop.f32.mrf.mxu0
        %v742 = vadd.f32 %v693, %v741
        %743 = vmatmul.bf16.gmra.mxu0 %v391
        %v744 = vpop.f32.mrf.mxu0
        %v745 = vadd.f32 %v696, %v744
        %v746 = vpop.f32.mrf.mxu0
        %v747 = vadd.f32 %v698, %v746
        %748 = vmatmul.bf16.gmra.mxu0 %v393
        %v749 = vpop.f32.mrf.mxu0
        %v750 = vadd.f32 %v701, %v749
        %v751 = vpop.f32.mrf.mxu0
        %v752 = vadd.f32 %v703, %v751
        %753 = vmatmul.bf16.gmra.mxu0 %v395
        %v754 = vpop.f32.mrf.mxu0
        %v755 = vadd.f32 %v706, %v754
        %v756 = vpop.f32.mrf.mxu0
        %v757 = vadd.f32 %v708, %v756
        %758 = vmatmul.bf16.gmra.mxu0 %v397
        %v759 = vpop.f32.mrf.mxu0
        %v760 = vadd.f32 %v711, %v759
        %v761 = vpop.f32.mrf.mxu0
        %v762 = vadd.f32 %v713, %v761
        %763 = vmatmul.bf16.gmra.mxu0 %v399
        %v764 = vpop.f32.mrf.mxu0
        %v765 = vadd.f32 %v716, %v764
        %v766 = vpop.f32.mrf.mxu0
        %v767 = vadd.f32 %v718, %v766
        %768 = vmatmul.bf16.gmra.mxu0 %v401
        %v769 = vpop.f32.mrf.mxu0
        %v770 = vadd.f32 %v721, %v769
        %v771 = vpop.f32.mrf.mxu0
        %v772 = vadd.f32 %v723, %v771
        %773 = vdwg.mxu0
        %s774 = scalar_lea.vmem %s242, 256 [#allocation5]
        %v775 = vld [vmem:[%s774] sm:$0xff]
        %v776 = vld [vmem:[%s774 + $0x8] sm:$0xff]
        %v777 = vld [vmem:[%s774 + $0x10] sm:$0xff]
        %v778 = vld [vmem:[%s774 + $0x18] sm:$0xff]
        %v779 = vld [vmem:[%s774 + $0x20] sm:$0xff]
        %v780 = vld [vmem:[%s774 + $0x28] sm:$0xff]
        %v781 = vld [vmem:[%s774 + $0x30] sm:$0xff]
        %v782 = vld [vmem:[%s774 + $0x38] sm:$0xff]
        %v783 = vld [vmem:[%s774 + $0x40] sm:$0xff]
        %v784 = vld [vmem:[%s774 + $0x48] sm:$0xff]
        %v785 = vld [vmem:[%s774 + $0x50] sm:$0xff]
        %v786 = vld [vmem:[%s774 + $0x58] sm:$0xff]
        %v787 = vld [vmem:[%s774 + $0x60] sm:$0xff]
        %v788 = vld [vmem:[%s774 + $0x68] sm:$0xff]
        %v789 = vld [vmem:[%s774 + $0x70] sm:$0xff]
        %v790 = vld [vmem:[%s774 + $0x78] sm:$0xff]
        %v791 = vld [vmem:[%s774 + $0x80] sm:$0xff]
        %v792 = vld [vmem:[%s774 + $0x88] sm:$0xff]
        %v793 = vld [vmem:[%s774 + $0x90] sm:$0xff]
        %v794 = vld [vmem:[%s774 + $0x98] sm:$0xff]
        %v795 = vld [vmem:[%s774 + $0xa0] sm:$0xff]
        %v796 = vld [vmem:[%s774 + $0xa8] sm:$0xff]
        %v797 = vld [vmem:[%s774 + $0xb0] sm:$0xff]
        %v798 = vld [vmem:[%s774 + $0xb8] sm:$0xff]
        %v799 = vld [vmem:[%s774 + $0xc0] sm:$0xff]
        %v800 = vld [vmem:[%s774 + $0xc8] sm:$0xff]
        %v801 = vld [vmem:[%s774 + $0xd0] sm:$0xff]
        %v802 = vld [vmem:[%s774 + $0xd8] sm:$0xff]
        %v803 = vld [vmem:[%s774 + $0xe0] sm:$0xff]
        %v804 = vld [vmem:[%s774 + $0xe8] sm:$0xff]
        %v805 = vld [vmem:[%s774 + $0xf0] sm:$0xff]
        %v806 = vld [vmem:[%s774 + $0xf8] sm:$0xff]
        %v839 = vunpack.c.l.b16 %v775
        %v840 = vunpack.c.h.b16 %v775
        %v841 = vunpack.c.l.b16 %v776
        %v842 = vunpack.c.h.b16 %v776
        %v843 = vunpack.c.l.b16 %v777
        %v844 = vunpack.c.h.b16 %v777
        %v845 = vunpack.c.l.b16 %v778
        %v846 = vunpack.c.h.b16 %v778
        %v847 = vunpack.c.l.b16 %v779
        %v848 = vunpack.c.h.b16 %v779
        %v849 = vunpack.c.l.b16 %v780
        %v850 = vunpack.c.h.b16 %v780
        %v851 = vunpack.c.l.b16 %v781
        %v852 = vunpack.c.h.b16 %v781
        %v853 = vunpack.c.l.b16 %v782
        %v854 = vunpack.c.h.b16 %v782
        %v855 = vunpack.c.l.b16 %v783
        %v856 = vunpack.c.h.b16 %v783
        %v857 = vunpack.c.l.b16 %v784
        %v858 = vunpack.c.h.b16 %v784
        %v859 = vunpack.c.l.b16 %v785
        %v860 = vunpack.c.h.b16 %v785
        %v861 = vunpack.c.l.b16 %v786
        %v862 = vunpack.c.h.b16 %v786
        %v863 = vunpack.c.l.b16 %v787
        %v864 = vunpack.c.h.b16 %v787
        %v865 = vunpack.c.l.b16 %v788
        %v866 = vunpack.c.h.b16 %v788
        %v867 = vunpack.c.l.b16 %v789
        %v868 = vunpack.c.h.b16 %v789
        %v869 = vunpack.c.l.b16 %v790
        %v870 = vunpack.c.h.b16 %v790
        %v871 = vunpack.c.l.b16 %v791
        %v872 = vunpack.c.h.b16 %v791
        %v873 = vunpack.c.l.b16 %v792
        %v874 = vunpack.c.h.b16 %v792
        %v875 = vunpack.c.l.b16 %v793
        %v876 = vunpack.c.h.b16 %v793
        %v877 = vunpack.c.l.b16 %v794
        %v878 = vunpack.c.h.b16 %v794
        %v879 = vunpack.c.l.b16 %v795
        %v880 = vunpack.c.h.b16 %v795
        %v881 = vunpack.c.l.b16 %v796
        %v882 = vunpack.c.h.b16 %v796
        %v883 = vunpack.c.l.b16 %v797
        %v884 = vunpack.c.h.b16 %v797
        %v885 = vunpack.c.l.b16 %v798
        %v886 = vunpack.c.h.b16 %v798
        %v887 = vunpack.c.l.b16 %v799
        %v888 = vunpack.c.h.b16 %v799
        %v889 = vunpack.c.l.b16 %v800
        %v890 = vunpack.c.h.b16 %v800
        %v891 = vunpack.c.l.b16 %v801
        %v892 = vunpack.c.h.b16 %v801
        %v893 = vunpack.c.l.b16 %v802
        %v894 = vunpack.c.h.b16 %v802
        %v895 = vunpack.c.l.b16 %v803
        %v896 = vunpack.c.h.b16 %v803
        %v897 = vunpack.c.l.b16 %v804
        %v898 = vunpack.c.h.b16 %v804
        %v899 = vunpack.c.l.b16 %v805
        %v900 = vunpack.c.h.b16 %v805
        %v901 = vunpack.c.l.b16 %v806
        %v902 = vunpack.c.h.b16 %v806
        %v903 = vpack.c.b16 %v841, %v839
        %v904 = vpack.c.b16 %v842, %v840
        %v905 = vpack.c.b16 %v845, %v843
        %v906 = vpack.c.b16 %v846, %v844
        %v907 = vpack.c.b16 %v849, %v847
        %v908 = vpack.c.b16 %v850, %v848
        %v909 = vpack.c.b16 %v853, %v851
        %v910 = vpack.c.b16 %v854, %v852
        %v911 = vpack.c.b16 %v857, %v855
        %v912 = vpack.c.b16 %v858, %v856
        %v913 = vpack.c.b16 %v861, %v859
        %v914 = vpack.c.b16 %v862, %v860
        %v915 = vpack.c.b16 %v865, %v863
        %v916 = vpack.c.b16 %v866, %v864
        %v917 = vpack.c.b16 %v869, %v867
        %v918 = vpack.c.b16 %v870, %v868
        %v919 = vpack.c.b16 %v873, %v871
        %v920 = vpack.c.b16 %v874, %v872
        %v921 = vpack.c.b16 %v877, %v875
        %v922 = vpack.c.b16 %v878, %v876
        %v923 = vpack.c.b16 %v881, %v879
        %v924 = vpack.c.b16 %v882, %v880
        %v925 = vpack.c.b16 %v885, %v883
        %v926 = vpack.c.b16 %v886, %v884
        %v927 = vpack.c.b16 %v889, %v887
        %v928 = vpack.c.b16 %v890, %v888
        %v929 = vpack.c.b16 %v893, %v891
        %v930 = vpack.c.b16 %v894, %v892
        %v931 = vpack.c.b16 %v897, %v895
        %v932 = vpack.c.b16 %v898, %v896
        %v933 = vpack.c.b16 %v901, %v899
        %v934 = vpack.c.b16 %v902, %v900
        %967 = vmatpush.bf16.msra.mxu0 %v917
        %968 = vmatpush.bf16.msra.mxu0 %v915
        %969 = vmatpush.bf16.msra.mxu0 %v913
        %970 = vmatpush.bf16.msra.mxu0 %v911
        %971 = vmatpush.bf16.msra.mxu0 %v909
        %972 = vmatpush.bf16.msra.mxu0 %v907
        %973 = vmatpush.bf16.msra.mxu0 %v905
        %974 = vmatpush.bf16.msra.mxu0 %v903
        %975 = vmatmul.bf16.gmra.mxu0 %v386
        %v976 = vpop.f32.mrf.mxu0
        %v977 = vadd.f32 0.0, %v976
        %v978 = vpop.f32.mrf.mxu0
        %v979 = vadd.f32 0.0, %v978
        %980 = vmatmul.bf16.gmra.mxu0 %v388
        %v981 = vpop.f32.mrf.mxu0
        %v982 = vadd.f32 0.0, %v981
        %v983 = vpop.f32.mrf.mxu0
        %v984 = vadd.f32 0.0, %v983
        %985 = vmatmul.bf16.gmra.mxu0 %v390
        %v986 = vpop.f32.mrf.mxu0
        %v987 = vadd.f32 0.0, %v986
        %v988 = vpop.f32.mrf.mxu0
        %v989 = vadd.f32 0.0, %v988
        %990 = vmatmul.bf16.gmra.mxu0 %v392
        %v991 = vpop.f32.mrf.mxu0
        %v992 = vadd.f32 0.0, %v991
        %v993 = vpop.f32.mrf.mxu0
        %v994 = vadd.f32 0.0, %v993
        %995 = vmatmul.bf16.gmra.mxu0 %v394
        %v996 = vpop.f32.mrf.mxu0
        %v997 = vadd.f32 0.0, %v996
        %v998 = vpop.f32.mrf.mxu0
        %v999 = vadd.f32 0.0, %v998
        %1000 = vmatmul.bf16.gmra.mxu0 %v396
        %v1001 = vpop.f32.mrf.mxu0
        %v1002 = vadd.f32 0.0, %v1001
        %v1003 = vpop.f32.mrf.mxu0
        %v1004 = vadd.f32 0.0, %v1003
        %1005 = vmatmul.bf16.gmra.mxu0 %v398
        %v1006 = vpop.f32.mrf.mxu0
        %v1007 = vadd.f32 0.0, %v1006
        %v1008 = vpop.f32.mrf.mxu0
        %v1009 = vadd.f32 0.0, %v1008
        %1010 = vmatmul.bf16.gmra.mxu0 %v400
        %v1011 = vpop.f32.mrf.mxu0
        %v1012 = vadd.f32 0.0, %v1011
        %v1013 = vpop.f32.mrf.mxu0
        %v1014 = vadd.f32 0.0, %v1013
        %1015 = vdwg.mxu0
        %1016 = vmatpush.bf16.msra.mxu0 %v933
        %1017 = vmatpush.bf16.msra.mxu0 %v931
        %1018 = vmatpush.bf16.msra.mxu0 %v929
        %1019 = vmatpush.bf16.msra.mxu0 %v927
        %1020 = vmatpush.bf16.msra.mxu0 %v925
        %1021 = vmatpush.bf16.msra.mxu0 %v923
        %1022 = vmatpush.bf16.msra.mxu0 %v921
        %1023 = vmatpush.bf16.msra.mxu0 %v919
        %1024 = vmatmul.bf16.gmra.mxu0 %v387
        %v1025 = vpop.f32.mrf.mxu0
        %v1026 = vadd.f32 %v977, %v1025
        %v1027 = vpop.f32.mrf.mxu0
        %v1028 = vadd.f32 %v979, %v1027
        %1029 = vmatmul.bf16.gmra.mxu0 %v389
        %v1030 = vpop.f32.mrf.mxu0
        %v1031 = vadd.f32 %v982, %v1030
        %v1032 = vpop.f32.mrf.mxu0
        %v1033 = vadd.f32 %v984, %v1032
        %1034 = vmatmul.bf16.gmra.mxu0 %v391
        %v1035 = vpop.f32.mrf.mxu0
        %v1036 = vadd.f32 %v987, %v1035
        %v1037 = vpop.f32.mrf.mxu0
        %v1038 = vadd.f32 %v989, %v1037
        %1039 = vmatmul.bf16.gmra.mxu0 %v393
        %v1040 = vpop.f32.mrf.mxu0
        %v1041 = vadd.f32 %v992, %v1040
        %v1042 = vpop.f32.mrf.mxu0
        %v1043 = vadd.f32 %v994, %v1042
        %1044 = vmatmul.bf16.gmra.mxu0 %v395
        %v1045 = vpop.f32.mrf.mxu0
        %v1046 = vadd.f32 %v997, %v1045
        %v1047 = vpop.f32.mrf.mxu0
        %v1048 = vadd.f32 %v999, %v1047
        %1049 = vmatmul.bf16.gmra.mxu0 %v397
        %v1050 = vpop.f32.mrf.mxu0
        %v1051 = vadd.f32 %v1002, %v1050
        %v1052 = vpop.f32.mrf.mxu0
        %v1053 = vadd.f32 %v1004, %v1052
        %1054 = vmatmul.bf16.gmra.mxu0 %v399
        %v1055 = vpop.f32.mrf.mxu0
        %v1056 = vadd.f32 %v1007, %v1055
        %v1057 = vpop.f32.mrf.mxu0
        %v1058 = vadd.f32 %v1009, %v1057
        %1059 = vmatmul.bf16.gmra.mxu0 %v401
        %v1060 = vpop.f32.mrf.mxu0
        %v1061 = vadd.f32 %v1012, %v1060
        %v1062 = vpop.f32.mrf.mxu0
        %v1063 = vadd.f32 %v1014, %v1062
        %1064 = vdwg.mxu0
        %1065 = vmatpush.bf16.msra.mxu0 %v918
        %1066 = vmatpush.bf16.msra.mxu0 %v916
        %1067 = vmatpush.bf16.msra.mxu0 %v914
        %1068 = vmatpush.bf16.msra.mxu0 %v912
        %1069 = vmatpush.bf16.msra.mxu0 %v910
        %1070 = vmatpush.bf16.msra.mxu0 %v908
        %1071 = vmatpush.bf16.msra.mxu0 %v906
        %1072 = vmatpush.bf16.msra.mxu0 %v904
        %1073 = vmatmul.bf16.gmra.mxu0 %v386
        %v1074 = vpop.f32.mrf.mxu0
        %v1075 = vadd.f32 0.0, %v1074
        %v1076 = vpop.f32.mrf.mxu0
        %v1077 = vadd.f32 0.0, %v1076
        %1078 = vmatmul.bf16.gmra.mxu0 %v388
        %v1079 = vpop.f32.mrf.mxu0
        %v1080 = vadd.f32 0.0, %v1079
        %v1081 = vpop.f32.mrf.mxu0
        %v1082 = vadd.f32 0.0, %v1081
        %1083 = vmatmul.bf16.gmra.mxu0 %v390
        %v1084 = vpop.f32.mrf.mxu0
        %v1085 = vadd.f32 0.0, %v1084
        %v1086 = vpop.f32.mrf.mxu0
        %v1087 = vadd.f32 0.0, %v1086
        %1088 = vmatmul.bf16.gmra.mxu0 %v392
        %v1089 = vpop.f32.mrf.mxu0
        %v1090 = vadd.f32 0.0, %v1089
        %v1091 = vpop.f32.mrf.mxu0
        %v1092 = vadd.f32 0.0, %v1091
        %1093 = vmatmul.bf16.gmra.mxu0 %v394
        %v1094 = vpop.f32.mrf.mxu0
        %v1095 = vadd.f32 0.0, %v1094
        %v1096 = vpop.f32.mrf.mxu0
        %v1097 = vadd.f32 0.0, %v1096
        %1098 = vmatmul.bf16.gmra.mxu0 %v396
        %v1099 = vpop.f32.mrf.mxu0
        %v1100 = vadd.f32 0.0, %v1099
        %v1101 = vpop.f32.mrf.mxu0
        %v1102 = vadd.f32 0.0, %v1101
        %1103 = vmatmul.bf16.gmra.mxu0 %v398
        %v1104 = vpop.f32.mrf.mxu0
        %v1105 = vadd.f32 0.0, %v1104
        %v1106 = vpop.f32.mrf.mxu0
        %v1107 = vadd.f32 0.0, %v1106
        %1108 = vmatmul.bf16.gmra.mxu0 %v400
        %v1109 = vpop.f32.mrf.mxu0
        %v1110 = vadd.f32 0.0, %v1109
        %v1111 = vpop.f32.mrf.mxu0
        %v1112 = vadd.f32 0.0, %v1111
        %1113 = vdwg.mxu0
        %1114 = vmatpush.bf16.msra.mxu0 %v934
        %1115 = vmatpush.bf16.msra.mxu0 %v932
        %1116 = vmatpush.bf16.msra.mxu0 %v930
        %1117 = vmatpush.bf16.msra.mxu0 %v928
        %1118 = vmatpush.bf16.msra.mxu0 %v926
        %1119 = vmatpush.bf16.msra.mxu0 %v924
        %1120 = vmatpush.bf16.msra.mxu0 %v922
        %1121 = vmatpush.bf16.msra.mxu0 %v920
        %1122 = vmatmul.bf16.gmra.mxu0 %v387
        %v1123 = vpop.f32.mrf.mxu0
        %v1124 = vadd.f32 %v1075, %v1123
        %v1125 = vpop.f32.mrf.mxu0
        %v1126 = vadd.f32 %v1077, %v1125
        %1127 = vmatmul.bf16.gmra.mxu0 %v389
        %v1128 = vpop.f32.mrf.mxu0
        %v1129 = vadd.f32 %v1080, %v1128
        %v1130 = vpop.f32.mrf.mxu0
        %v1131 = vadd.f32 %v1082, %v1130
        %1132 = vmatmul.bf16.gmra.mxu0 %v391
        %v1133 = vpop.f32.mrf.mxu0
        %v1134 = vadd.f32 %v1085, %v1133
        %v1135 = vpop.f32.mrf.mxu0
        %v1136 = vadd.f32 %v1087, %v1135
        %1137 = vmatmul.bf16.gmra.mxu0 %v393
        %v1138 = vpop.f32.mrf.mxu0
        %v1139 = vadd.f32 %v1090, %v1138
        %v1140 = vpop.f32.mrf.mxu0
        %v1141 = vadd.f32 %v1092, %v1140
        %1142 = vmatmul.bf16.gmra.mxu0 %v395
        %v1143 = vpop.f32.mrf.mxu0
        %v1144 = vadd.f32 %v1095, %v1143
        %v1145 = vpop.f32.mrf.mxu0
        %v1146 = vadd.f32 %v1097, %v1145
        %1147 = vmatmul.bf16.gmra.mxu0 %v397
        %v1148 = vpop.f32.mrf.mxu0
        %v1149 = vadd.f32 %v1100, %v1148
        %v1150 = vpop.f32.mrf.mxu0
        %v1151 = vadd.f32 %v1102, %v1150
        %1152 = vmatmul.bf16.gmra.mxu0 %v399
        %v1153 = vpop.f32.mrf.mxu0
        %v1154 = vadd.f32 %v1105, %v1153
        %v1155 = vpop.f32.mrf.mxu0
        %v1156 = vadd.f32 %v1107, %v1155
        %1157 = vmatmul.bf16.gmra.mxu0 %v401
        %v1158 = vpop.f32.mrf.mxu0
        %v1159 = vadd.f32 %v1110, %v1158
        %v1160 = vpop.f32.mrf.mxu0
        %v1161 = vadd.f32 %v1112, %v1160
        %1162 = vdwg.mxu0
        %v1163 = vxor.u32 %v637, 2147483648
        %v1164 = vxor.u32 %v735, 2147483648
        %v1165 = vxor.u32 %v639, 2147483648
        %v1166 = vxor.u32 %v737, 2147483648
        %v1167 = vxor.u32 %v642, 2147483648
        %v1168 = vxor.u32 %v740, 2147483648
        %v1169 = vxor.u32 %v644, 2147483648
        %v1170 = vxor.u32 %v742, 2147483648
        %v1171 = vxor.u32 %v647, 2147483648
        %v1172 = vxor.u32 %v745, 2147483648
        %v1173 = vxor.u32 %v649, 2147483648
        %v1174 = vxor.u32 %v747, 2147483648
        %v1175 = vxor.u32 %v652, 2147483648
        %v1176 = vxor.u32 %v750, 2147483648
        %v1177 = vxor.u32 %v654, 2147483648
        %v1178 = vxor.u32 %v752, 2147483648
        %v1179 = vxor.u32 %v657, 2147483648
        %v1180 = vxor.u32 %v755, 2147483648
        %v1181 = vxor.u32 %v659, 2147483648
        %v1182 = vxor.u32 %v757, 2147483648
        %v1183 = vxor.u32 %v662, 2147483648
        %v1184 = vxor.u32 %v760, 2147483648
        %v1185 = vxor.u32 %v664, 2147483648
        %v1186 = vxor.u32 %v762, 2147483648
        %v1187 = vxor.u32 %v667, 2147483648
        %v1188 = vxor.u32 %v765, 2147483648
        %v1189 = vxor.u32 %v669, 2147483648
        %v1190 = vxor.u32 %v767, 2147483648
        %v1191 = vxor.u32 %v672, 2147483648
        %v1192 = vxor.u32 %v770, 2147483648
        %v1193 = vxor.u32 %v674, 2147483648
        %v1194 = vxor.u32 %v772, 2147483648
        %v1195 = vmul.f32 %v1163, 1.442695
        %v1196 = vpow.pop %v1195
        %v1197 = vmul.f32 %v1164, 1.442695
        %v1198 = vpow.pop %v1197
        %v1199 = vmul.f32 %v1165, 1.442695
        %v1200 = vpow.pop %v1199
        %v1201 = vmul.f32 %v1166, 1.442695
        %v1202 = vpow.pop %v1201
        %v1203 = vmul.f32 %v1167, 1.442695
        %v1204 = vpow.pop %v1203
        %v1205 = vmul.f32 %v1168, 1.442695
        %v1206 = vpow.pop %v1205
        %v1207 = vmul.f32 %v1169, 1.442695
        %v1208 = vpow.pop %v1207
        %v1209 = vmul.f32 %v1170, 1.442695
        %v1210 = vpow.pop %v1209
        %v1211 = vmul.f32 %v1171, 1.442695
        %v1212 = vpow.pop %v1211
        %v1213 = vmul.f32 %v1172, 1.442695
        %v1214 = vpow.pop %v1213
        %v1215 = vmul.f32 %v1173, 1.442695
        %v1216 = vpow.pop %v1215
        %v1217 = vmul.f32 %v1174, 1.442695
        %v1218 = vpow.pop %v1217
        %v1219 = vmul.f32 %v1175, 1.442695
        %v1220 = vpow.pop %v1219
        %v1221 = vmul.f32 %v1176, 1.442695
        %v1222 = vpow.pop %v1221
        %v1223 = vmul.f32 %v1177, 1.442695
        %v1224 = vpow.pop %v1223
        %v1225 = vmul.f32 %v1178, 1.442695
        %v1226 = vpow.pop %v1225
        %v1227 = vmul.f32 %v1179, 1.442695
        %v1228 = vpow.pop %v1227
        %v1229 = vmul.f32 %v1180, 1.442695
        %v1230 = vpow.pop %v1229
        %v1231 = vmul.f32 %v1181, 1.442695
        %v1232 = vpow.pop %v1231
        %v1233 = vmul.f32 %v1182, 1.442695
        %v1234 = vpow.pop %v1233
        %v1235 = vmul.f32 %v1183, 1.442695
        %v1236 = vpow.pop %v1235
        %v1237 = vmul.f32 %v1184, 1.442695
        %v1238 = vpow.pop %v1237
        %v1239 = vmul.f32 %v1185, 1.442695
        %v1240 = vpow.pop %v1239
        %v1241 = vmul.f32 %v1186, 1.442695
        %v1242 = vpow.pop %v1241
        %v1243 = vmul.f32 %v1187, 1.442695
        %v1244 = vpow.pop %v1243
        %v1245 = vmul.f32 %v1188, 1.442695
        %v1246 = vpow.pop %v1245
        %v1247 = vmul.f32 %v1189, 1.442695
        %v1248 = vpow.pop %v1247
        %v1249 = vmul.f32 %v1190, 1.442695
        %v1250 = vpow.pop %v1249
        %v1251 = vmul.f32 %v1191, 1.442695
        %v1252 = vpow.pop %v1251
        %v1253 = vmul.f32 %v1192, 1.442695
        %v1254 = vpow.pop %v1253
        %v1255 = vmul.f32 %v1193, 1.442695
        %v1256 = vpow.pop %v1255
        %v1257 = vmul.f32 %v1194, 1.442695
        %v1258 = vpow.pop %v1257
        %v1259 = vadd.f32 %v1196, 1.0
        %v1260 = vadd.f32 %v1198, 1.0
        %v1261 = vadd.f32 %v1200, 1.0
        %v1262 = vadd.f32 %v1202, 1.0
        %v1263 = vadd.f32 %v1204, 1.0
        %v1264 = vadd.f32 %v1206, 1.0
        %v1265 = vadd.f32 %v1208, 1.0
        %v1266 = vadd.f32 %v1210, 1.0
        %v1267 = vadd.f32 %v1212, 1.0
        %v1268 = vadd.f32 %v1214, 1.0
        %v1269 = vadd.f32 %v1216, 1.0
        %v1270 = vadd.f32 %v1218, 1.0
        %v1271 = vadd.f32 %v1220, 1.0
        %v1272 = vadd.f32 %v1222, 1.0
        %v1273 = vadd.f32 %v1224, 1.0
        %v1274 = vadd.f32 %v1226, 1.0
        %v1275 = vadd.f32 %v1228, 1.0
        %v1276 = vadd.f32 %v1230, 1.0
        %v1277 = vadd.f32 %v1232, 1.0
        %v1278 = vadd.f32 %v1234, 1.0
        %v1279 = vadd.f32 %v1236, 1.0
        %v1280 = vadd.f32 %v1238, 1.0
        %v1281 = vadd.f32 %v1240, 1.0
        %v1282 = vadd.f32 %v1242, 1.0
        %v1283 = vadd.f32 %v1244, 1.0
        %v1284 = vadd.f32 %v1246, 1.0
        %v1285 = vadd.f32 %v1248, 1.0
        %v1286 = vadd.f32 %v1250, 1.0
        %v1287 = vadd.f32 %v1252, 1.0
        %v1288 = vadd.f32 %v1254, 1.0
        %v1289 = vadd.f32 %v1256, 1.0
        %v1290 = vadd.f32 %v1258, 1.0
        %v1291 = vrcp.pop %v1259
        %v1292 = vmul.f32 %v1259, %v1291
        %v1293 = vsub.f32 1.0, %v1292
        %v1294 = vmul.f32 %v1291, %v1293
        %v1295 = vadd.f32 %v1291, %v1294
        %vm1296 = vweird.f32 %v1259
        %vm1297 = vweird.f32 %v1291
        %vm1298 = vmor %vm1296, %vm1297
        %v1299 = vsel %vm1298, %v1291, %v1295
        %v1300 = vand.u32 2147483647, %v1259
        %vm1301 = vcmp.eq.f32.partialorder %v1300, 8.507059e+37
        %v1302 = vand.u32 %v1259, 2147483648
        %v1303 = vor.u32 1.1754944e-38, %v1302
        %v1304 = vsel %vm1301, %v1303, %v1299
        %v1305 = vmul.f32 1.0, %v1304
        %v1306 = vrcp.pop %v1260
        %v1307 = vmul.f32 %v1260, %v1306
        %v1308 = vsub.f32 1.0, %v1307
        %v1309 = vmul.f32 %v1306, %v1308
        %v1310 = vadd.f32 %v1306, %v1309
        %vm1311 = vweird.f32 %v1260
        %vm1312 = vweird.f32 %v1306
        %vm1313 = vmor %vm1311, %vm1312
        %v1314 = vsel %vm1313, %v1306, %v1310
        %v1315 = vand.u32 2147483647, %v1260
        %vm1316 = vcmp.eq.f32.partialorder %v1315, 8.507059e+37
        %v1317 = vand.u32 %v1260, 2147483648
        %v1318 = vor.u32 1.1754944e-38, %v1317
        %v1319 = vsel %vm1316, %v1318, %v1314
        %v1320 = vmul.f32 1.0, %v1319
        %v1321 = vrcp.pop %v1261
        %v1322 = vmul.f32 %v1261, %v1321
        %v1323 = vsub.f32 1.0, %v1322
        %v1324 = vmul.f32 %v1321, %v1323
        %v1325 = vadd.f32 %v1321, %v1324
        %vm1326 = vweird.f32 %v1261
        %vm1327 = vweird.f32 %v1321
        %vm1328 = vmor %vm1326, %vm1327
        %v1329 = vsel %vm1328, %v1321, %v1325
        %v1330 = vand.u32 2147483647, %v1261
        %vm1331 = vcmp.eq.f32.partialorder %v1330, 8.507059e+37
        %v1332 = vand.u32 %v1261, 2147483648
        %v1333 = vor.u32 1.1754944e-38, %v1332
        %v1334 = vsel %vm1331, %v1333, %v1329
        %v1335 = vmul.f32 1.0, %v1334
        %v1336 = vrcp.pop %v1262
        %v1337 = vmul.f32 %v1262, %v1336
        %v1338 = vsub.f32 1.0, %v1337
        %v1339 = vmul.f32 %v1336, %v1338
        %v1340 = vadd.f32 %v1336, %v1339
        %vm1341 = vweird.f32 %v1262
        %vm1342 = vweird.f32 %v1336
        %vm1343 = vmor %vm1341, %vm1342
        %v1344 = vsel %vm1343, %v1336, %v1340
        %v1345 = vand.u32 2147483647, %v1262
        %vm1346 = vcmp.eq.f32.partialorder %v1345, 8.507059e+37
        %v1347 = vand.u32 %v1262, 2147483648
        %v1348 = vor.u32 1.1754944e-38, %v1347
        %v1349 = vsel %vm1346, %v1348, %v1344
        %v1350 = vmul.f32 1.0, %v1349
        %v1351 = vrcp.pop %v1263
        %v1352 = vmul.f32 %v1263, %v1351
        %v1353 = vsub.f32 1.0, %v1352
        %v1354 = vmul.f32 %v1351, %v1353
        %v1355 = vadd.f32 %v1351, %v1354
        %vm1356 = vweird.f32 %v1263
        %vm1357 = vweird.f32 %v1351
        %vm1358 = vmor %vm1356, %vm1357
        %v1359 = vsel %vm1358, %v1351, %v1355
        %v1360 = vand.u32 2147483647, %v1263
        %vm1361 = vcmp.eq.f32.partialorder %v1360, 8.507059e+37
        %v1362 = vand.u32 %v1263, 2147483648
        %v1363 = vor.u32 1.1754944e-38, %v1362
        %v1364 = vsel %vm1361, %v1363, %v1359
        %v1365 = vmul.f32 1.0, %v1364
        %v1366 = vrcp.pop %v1264
        %v1367 = vmul.f32 %v1264, %v1366
        %v1368 = vsub.f32 1.0, %v1367
        %v1369 = vmul.f32 %v1366, %v1368
        %v1370 = vadd.f32 %v1366, %v1369
        %vm1371 = vweird.f32 %v1264
        %vm1372 = vweird.f32 %v1366
        %vm1373 = vmor %vm1371, %vm1372
        %v1374 = vsel %vm1373, %v1366, %v1370
        %v1375 = vand.u32 2147483647, %v1264
        %vm1376 = vcmp.eq.f32.partialorder %v1375, 8.507059e+37
        %v1377 = vand.u32 %v1264, 2147483648
        %v1378 = vor.u32 1.1754944e-38, %v1377
        %v1379 = vsel %vm1376, %v1378, %v1374
        %v1380 = vmul.f32 1.0, %v1379
        %v1381 = vrcp.pop %v1265
        %v1382 = vmul.f32 %v1265, %v1381
        %v1383 = vsub.f32 1.0, %v1382
        %v1384 = vmul.f32 %v1381, %v1383
        %v1385 = vadd.f32 %v1381, %v1384
        %vm1386 = vweird.f32 %v1265
        %vm1387 = vweird.f32 %v1381
        %vm1388 = vmor %vm1386, %vm1387
        %v1389 = vsel %vm1388, %v1381, %v1385
        %v1390 = vand.u32 2147483647, %v1265
        %vm1391 = vcmp.eq.f32.partialorder %v1390, 8.507059e+37
        %v1392 = vand.u32 %v1265, 2147483648
        %v1393 = vor.u32 1.1754944e-38, %v1392
        %v1394 = vsel %vm1391, %v1393, %v1389
        %v1395 = vmul.f32 1.0, %v1394
        %v1396 = vrcp.pop %v1266
        %v1397 = vmul.f32 %v1266, %v1396
        %v1398 = vsub.f32 1.0, %v1397
        %v1399 = vmul.f32 %v1396, %v1398
        %v1400 = vadd.f32 %v1396, %v1399
        %vm1401 = vweird.f32 %v1266
        %vm1402 = vweird.f32 %v1396
        %vm1403 = vmor %vm1401, %vm1402
        %v1404 = vsel %vm1403, %v1396, %v1400
        %v1405 = vand.u32 2147483647, %v1266
        %vm1406 = vcmp.eq.f32.partialorder %v1405, 8.507059e+37
        %v1407 = vand.u32 %v1266, 2147483648
        %v1408 = vor.u32 1.1754944e-38, %v1407
        %v1409 = vsel %vm1406, %v1408, %v1404
        %v1410 = vmul.f32 1.0, %v1409
        %v1411 = vrcp.pop %v1267
        %v1412 = vmul.f32 %v1267, %v1411
        %v1413 = vsub.f32 1.0, %v1412
        %v1414 = vmul.f32 %v1411, %v1413
        %v1415 = vadd.f32 %v1411, %v1414
        %vm1416 = vweird.f32 %v1267
        %vm1417 = vweird.f32 %v1411
        %vm1418 = vmor %vm1416, %vm1417
        %v1419 = vsel %vm1418, %v1411, %v1415
        %v1420 = vand.u32 2147483647, %v1267
        %vm1421 = vcmp.eq.f32.partialorder %v1420, 8.507059e+37
        %v1422 = vand.u32 %v1267, 2147483648
        %v1423 = vor.u32 1.1754944e-38, %v1422
        %v1424 = vsel %vm1421, %v1423, %v1419
        %v1425 = vmul.f32 1.0, %v1424
        %v1426 = vrcp.pop %v1268
        %v1427 = vmul.f32 %v1268, %v1426
        %v1428 = vsub.f32 1.0, %v1427
        %v1429 = vmul.f32 %v1426, %v1428
        %v1430 = vadd.f32 %v1426, %v1429
        %vm1431 = vweird.f32 %v1268
        %vm1432 = vweird.f32 %v1426
        %vm1433 = vmor %vm1431, %vm1432
        %v1434 = vsel %vm1433, %v1426, %v1430
        %v1435 = vand.u32 2147483647, %v1268
        %vm1436 = vcmp.eq.f32.partialorder %v1435, 8.507059e+37
        %v1437 = vand.u32 %v1268, 2147483648
        %v1438 = vor.u32 1.1754944e-38, %v1437
        %v1439 = vsel %vm1436, %v1438, %v1434
        %v1440 = vmul.f32 1.0, %v1439
        %v1441 = vrcp.pop %v1269
        %v1442 = vmul.f32 %v1269, %v1441
        %v1443 = vsub.f32 1.0, %v1442
        %v1444 = vmul.f32 %v1441, %v1443
        %v1445 = vadd.f32 %v1441, %v1444
        %vm1446 = vweird.f32 %v1269
        %vm1447 = vweird.f32 %v1441
        %vm1448 = vmor %vm1446, %vm1447
        %v1449 = vsel %vm1448, %v1441, %v1445
        %v1450 = vand.u32 2147483647, %v1269
        %vm1451 = vcmp.eq.f32.partialorder %v1450, 8.507059e+37
        %v1452 = vand.u32 %v1269, 2147483648
        %v1453 = vor.u32 1.1754944e-38, %v1452
        %v1454 = vsel %vm1451, %v1453, %v1449
        %v1455 = vmul.f32 1.0, %v1454
        %v1456 = vrcp.pop %v1270
        %v1457 = vmul.f32 %v1270, %v1456
        %v1458 = vsub.f32 1.0, %v1457
        %v1459 = vmul.f32 %v1456, %v1458
        %v1460 = vadd.f32 %v1456, %v1459
        %vm1461 = vweird.f32 %v1270
        %vm1462 = vweird.f32 %v1456
        %vm1463 = vmor %vm1461, %vm1462
        %v1464 = vsel %vm1463, %v1456, %v1460
        %v1465 = vand.u32 2147483647, %v1270
        %vm1466 = vcmp.eq.f32.partialorder %v1465, 8.507059e+37
        %v1467 = vand.u32 %v1270, 2147483648
        %v1468 = vor.u32 1.1754944e-38, %v1467
        %v1469 = vsel %vm1466, %v1468, %v1464
        %v1470 = vmul.f32 1.0, %v1469
        %v1471 = vrcp.pop %v1271
        %v1472 = vmul.f32 %v1271, %v1471
        %v1473 = vsub.f32 1.0, %v1472
        %v1474 = vmul.f32 %v1471, %v1473
        %v1475 = vadd.f32 %v1471, %v1474
        %vm1476 = vweird.f32 %v1271
        %vm1477 = vweird.f32 %v1471
        %vm1478 = vmor %vm1476, %vm1477
        %v1479 = vsel %vm1478, %v1471, %v1475
        %v1480 = vand.u32 2147483647, %v1271
        %vm1481 = vcmp.eq.f32.partialorder %v1480, 8.507059e+37
        %v1482 = vand.u32 %v1271, 2147483648
        %v1483 = vor.u32 1.1754944e-38, %v1482
        %v1484 = vsel %vm1481, %v1483, %v1479
        %v1485 = vmul.f32 1.0, %v1484
        %v1486 = vrcp.pop %v1272
        %v1487 = vmul.f32 %v1272, %v1486
        %v1488 = vsub.f32 1.0, %v1487
        %v1489 = vmul.f32 %v1486, %v1488
        %v1490 = vadd.f32 %v1486, %v1489
        %vm1491 = vweird.f32 %v1272
        %vm1492 = vweird.f32 %v1486
        %vm1493 = vmor %vm1491, %vm1492
        %v1494 = vsel %vm1493, %v1486, %v1490
        %v1495 = vand.u32 2147483647, %v1272
        %vm1496 = vcmp.eq.f32.partialorder %v1495, 8.507059e+37
        %v1497 = vand.u32 %v1272, 2147483648
        %v1498 = vor.u32 1.1754944e-38, %v1497
        %v1499 = vsel %vm1496, %v1498, %v1494
        %v1500 = vmul.f32 1.0, %v1499
        %v1501 = vrcp.pop %v1273
        %v1502 = vmul.f32 %v1273, %v1501
        %v1503 = vsub.f32 1.0, %v1502
        %v1504 = vmul.f32 %v1501, %v1503
        %v1505 = vadd.f32 %v1501, %v1504
        %vm1506 = vweird.f32 %v1273
        %vm1507 = vweird.f32 %v1501
        %vm1508 = vmor %vm1506, %vm1507
        %v1509 = vsel %vm1508, %v1501, %v1505
        %v1510 = vand.u32 2147483647, %v1273
        %vm1511 = vcmp.eq.f32.partialorder %v1510, 8.507059e+37
        %v1512 = vand.u32 %v1273, 2147483648
        %v1513 = vor.u32 1.1754944e-38, %v1512
        %v1514 = vsel %vm1511, %v1513, %v1509
        %v1515 = vmul.f32 1.0, %v1514
        %v1516 = vrcp.pop %v1274
        %v1517 = vmul.f32 %v1274, %v1516
        %v1518 = vsub.f32 1.0, %v1517
        %v1519 = vmul.f32 %v1516, %v1518
        %v1520 = vadd.f32 %v1516, %v1519
        %vm1521 = vweird.f32 %v1274
        %vm1522 = vweird.f32 %v1516
        %vm1523 = vmor %vm1521, %vm1522
        %v1524 = vsel %vm1523, %v1516, %v1520
        %v1525 = vand.u32 2147483647, %v1274
        %vm1526 = vcmp.eq.f32.partialorder %v1525, 8.507059e+37
        %v1527 = vand.u32 %v1274, 2147483648
        %v1528 = vor.u32 1.1754944e-38, %v1527
        %v1529 = vsel %vm1526, %v1528, %v1524
        %v1530 = vmul.f32 1.0, %v1529
        %v1531 = vrcp.pop %v1275
        %v1532 = vmul.f32 %v1275, %v1531
        %v1533 = vsub.f32 1.0, %v1532
        %v1534 = vmul.f32 %v1531, %v1533
        %v1535 = vadd.f32 %v1531, %v1534
        %vm1536 = vweird.f32 %v1275
        %vm1537 = vweird.f32 %v1531
        %vm1538 = vmor %vm1536, %vm1537
        %v1539 = vsel %vm1538, %v1531, %v1535
        %v1540 = vand.u32 2147483647, %v1275
        %vm1541 = vcmp.eq.f32.partialorder %v1540, 8.507059e+37
        %v1542 = vand.u32 %v1275, 2147483648
        %v1543 = vor.u32 1.1754944e-38, %v1542
        %v1544 = vsel %vm1541, %v1543, %v1539
        %v1545 = vmul.f32 1.0, %v1544
        %v1546 = vrcp.pop %v1276
        %v1547 = vmul.f32 %v1276, %v1546
        %v1548 = vsub.f32 1.0, %v1547
        %v1549 = vmul.f32 %v1546, %v1548
        %v1550 = vadd.f32 %v1546, %v1549
        %vm1551 = vweird.f32 %v1276
        %vm1552 = vweird.f32 %v1546
        %vm1553 = vmor %vm1551, %vm1552
        %v1554 = vsel %vm1553, %v1546, %v1550
        %v1555 = vand.u32 2147483647, %v1276
        %vm1556 = vcmp.eq.f32.partialorder %v1555, 8.507059e+37
        %v1557 = vand.u32 %v1276, 2147483648
        %v1558 = vor.u32 1.1754944e-38, %v1557
        %v1559 = vsel %vm1556, %v1558, %v1554
        %v1560 = vmul.f32 1.0, %v1559
        %v1561 = vrcp.pop %v1277
        %v1562 = vmul.f32 %v1277, %v1561
        %v1563 = vsub.f32 1.0, %v1562
        %v1564 = vmul.f32 %v1561, %v1563
        %v1565 = vadd.f32 %v1561, %v1564
        %vm1566 = vweird.f32 %v1277
        %vm1567 = vweird.f32 %v1561
        %vm1568 = vmor %vm1566, %vm1567
        %v1569 = vsel %vm1568, %v1561, %v1565
        %v1570 = vand.u32 2147483647, %v1277
        %vm1571 = vcmp.eq.f32.partialorder %v1570, 8.507059e+37
        %v1572 = vand.u32 %v1277, 2147483648
        %v1573 = vor.u32 1.1754944e-38, %v1572
        %v1574 = vsel %vm1571, %v1573, %v1569
        %v1575 = vmul.f32 1.0, %v1574
        %v1576 = vrcp.pop %v1278
        %v1577 = vmul.f32 %v1278, %v1576
        %v1578 = vsub.f32 1.0, %v1577
        %v1579 = vmul.f32 %v1576, %v1578
        %v1580 = vadd.f32 %v1576, %v1579
        %vm1581 = vweird.f32 %v1278
        %vm1582 = vweird.f32 %v1576
        %vm1583 = vmor %vm1581, %vm1582
        %v1584 = vsel %vm1583, %v1576, %v1580
        %v1585 = vand.u32 2147483647, %v1278
        %vm1586 = vcmp.eq.f32.partialorder %v1585, 8.507059e+37
        %v1587 = vand.u32 %v1278, 2147483648
        %v1588 = vor.u32 1.1754944e-38, %v1587
        %v1589 = vsel %vm1586, %v1588, %v1584
        %v1590 = vmul.f32 1.0, %v1589
        %v1591 = vrcp.pop %v1279
        %v1592 = vmul.f32 %v1279, %v1591
        %v1593 = vsub.f32 1.0, %v1592
        %v1594 = vmul.f32 %v1591, %v1593
        %v1595 = vadd.f32 %v1591, %v1594
        %vm1596 = vweird.f32 %v1279
        %vm1597 = vweird.f32 %v1591
        %vm1598 = vmor %vm1596, %vm1597
        %v1599 = vsel %vm1598, %v1591, %v1595
        %v1600 = vand.u32 2147483647, %v1279
        %vm1601 = vcmp.eq.f32.partialorder %v1600, 8.507059e+37
        %v1602 = vand.u32 %v1279, 2147483648
        %v1603 = vor.u32 1.1754944e-38, %v1602
        %v1604 = vsel %vm1601, %v1603, %v1599
        %v1605 = vmul.f32 1.0, %v1604
        %v1606 = vrcp.pop %v1280
        %v1607 = vmul.f32 %v1280, %v1606
        %v1608 = vsub.f32 1.0, %v1607
        %v1609 = vmul.f32 %v1606, %v1608
        %v1610 = vadd.f32 %v1606, %v1609
        %vm1611 = vweird.f32 %v1280
        %vm1612 = vweird.f32 %v1606
        %vm1613 = vmor %vm1611, %vm1612
        %v1614 = vsel %vm1613, %v1606, %v1610
        %v1615 = vand.u32 2147483647, %v1280
        %vm1616 = vcmp.eq.f32.partialorder %v1615, 8.507059e+37
        %v1617 = vand.u32 %v1280, 2147483648
        %v1618 = vor.u32 1.1754944e-38, %v1617
        %v1619 = vsel %vm1616, %v1618, %v1614
        %v1620 = vmul.f32 1.0, %v1619
        %v1621 = vrcp.pop %v1281
        %v1622 = vmul.f32 %v1281, %v1621
        %v1623 = vsub.f32 1.0, %v1622
        %v1624 = vmul.f32 %v1621, %v1623
        %v1625 = vadd.f32 %v1621, %v1624
        %vm1626 = vweird.f32 %v1281
        %vm1627 = vweird.f32 %v1621
        %vm1628 = vmor %vm1626, %vm1627
        %v1629 = vsel %vm1628, %v1621, %v1625
        %v1630 = vand.u32 2147483647, %v1281
        %vm1631 = vcmp.eq.f32.partialorder %v1630, 8.507059e+37
        %v1632 = vand.u32 %v1281, 2147483648
        %v1633 = vor.u32 1.1754944e-38, %v1632
        %v1634 = vsel %vm1631, %v1633, %v1629
        %v1635 = vmul.f32 1.0, %v1634
        %v1636 = vrcp.pop %v1282
        %v1637 = vmul.f32 %v1282, %v1636
        %v1638 = vsub.f32 1.0, %v1637
        %v1639 = vmul.f32 %v1636, %v1638
        %v1640 = vadd.f32 %v1636, %v1639
        %vm1641 = vweird.f32 %v1282
        %vm1642 = vweird.f32 %v1636
        %vm1643 = vmor %vm1641, %vm1642
        %v1644 = vsel %vm1643, %v1636, %v1640
        %v1645 = vand.u32 2147483647, %v1282
        %vm1646 = vcmp.eq.f32.partialorder %v1645, 8.507059e+37
        %v1647 = vand.u32 %v1282, 2147483648
        %v1648 = vor.u32 1.1754944e-38, %v1647
        %v1649 = vsel %vm1646, %v1648, %v1644
        %v1650 = vmul.f32 1.0, %v1649
        %v1651 = vrcp.pop %v1283
        %v1652 = vmul.f32 %v1283, %v1651
        %v1653 = vsub.f32 1.0, %v1652
        %v1654 = vmul.f32 %v1651, %v1653
        %v1655 = vadd.f32 %v1651, %v1654
        %vm1656 = vweird.f32 %v1283
        %vm1657 = vweird.f32 %v1651
        %vm1658 = vmor %vm1656, %vm1657
        %v1659 = vsel %vm1658, %v1651, %v1655
        %v1660 = vand.u32 2147483647, %v1283
        %vm1661 = vcmp.eq.f32.partialorder %v1660, 8.507059e+37
        %v1662 = vand.u32 %v1283, 2147483648
        %v1663 = vor.u32 1.1754944e-38, %v1662
        %v1664 = vsel %vm1661, %v1663, %v1659
        %v1665 = vmul.f32 1.0, %v1664
        %v1666 = vrcp.pop %v1284
        %v1667 = vmul.f32 %v1284, %v1666
        %v1668 = vsub.f32 1.0, %v1667
        %v1669 = vmul.f32 %v1666, %v1668
        %v1670 = vadd.f32 %v1666, %v1669
        %vm1671 = vweird.f32 %v1284
        %vm1672 = vweird.f32 %v1666
        %vm1673 = vmor %vm1671, %vm1672
        %v1674 = vsel %vm1673, %v1666, %v1670
        %v1675 = vand.u32 2147483647, %v1284
        %vm1676 = vcmp.eq.f32.partialorder %v1675, 8.507059e+37
        %v1677 = vand.u32 %v1284, 2147483648
        %v1678 = vor.u32 1.1754944e-38, %v1677
        %v1679 = vsel %vm1676, %v1678, %v1674
        %v1680 = vmul.f32 1.0, %v1679
        %v1681 = vrcp.pop %v1285
        %v1682 = vmul.f32 %v1285, %v1681
        %v1683 = vsub.f32 1.0, %v1682
        %v1684 = vmul.f32 %v1681, %v1683
        %v1685 = vadd.f32 %v1681, %v1684
        %vm1686 = vweird.f32 %v1285
        %vm1687 = vweird.f32 %v1681
        %vm1688 = vmor %vm1686, %vm1687
        %v1689 = vsel %vm1688, %v1681, %v1685
        %v1690 = vand.u32 2147483647, %v1285
        %vm1691 = vcmp.eq.f32.partialorder %v1690, 8.507059e+37
        %v1692 = vand.u32 %v1285, 2147483648
        %v1693 = vor.u32 1.1754944e-38, %v1692
        %v1694 = vsel %vm1691, %v1693, %v1689
        %v1695 = vmul.f32 1.0, %v1694
        %v1696 = vrcp.pop %v1286
        %v1697 = vmul.f32 %v1286, %v1696
        %v1698 = vsub.f32 1.0, %v1697
        %v1699 = vmul.f32 %v1696, %v1698
        %v1700 = vadd.f32 %v1696, %v1699
        %vm1701 = vweird.f32 %v1286
        %vm1702 = vweird.f32 %v1696
        %vm1703 = vmor %vm1701, %vm1702
        %v1704 = vsel %vm1703, %v1696, %v1700
        %v1705 = vand.u32 2147483647, %v1286
        %vm1706 = vcmp.eq.f32.partialorder %v1705, 8.507059e+37
        %v1707 = vand.u32 %v1286, 2147483648
        %v1708 = vor.u32 1.1754944e-38, %v1707
        %v1709 = vsel %vm1706, %v1708, %v1704
        %v1710 = vmul.f32 1.0, %v1709
        %v1711 = vrcp.pop %v1287
        %v1712 = vmul.f32 %v1287, %v1711
        %v1713 = vsub.f32 1.0, %v1712
        %v1714 = vmul.f32 %v1711, %v1713
        %v1715 = vadd.f32 %v1711, %v1714
        %vm1716 = vweird.f32 %v1287
        %vm1717 = vweird.f32 %v1711
        %vm1718 = vmor %vm1716, %vm1717
        %v1719 = vsel %vm1718, %v1711, %v1715
        %v1720 = vand.u32 2147483647, %v1287
        %vm1721 = vcmp.eq.f32.partialorder %v1720, 8.507059e+37
        %v1722 = vand.u32 %v1287, 2147483648
        %v1723 = vor.u32 1.1754944e-38, %v1722
        %v1724 = vsel %vm1721, %v1723, %v1719
        %v1725 = vmul.f32 1.0, %v1724
        %v1726 = vrcp.pop %v1288
        %v1727 = vmul.f32 %v1288, %v1726
        %v1728 = vsub.f32 1.0, %v1727
        %v1729 = vmul.f32 %v1726, %v1728
        %v1730 = vadd.f32 %v1726, %v1729
        %vm1731 = vweird.f32 %v1288
        %vm1732 = vweird.f32 %v1726
        %vm1733 = vmor %vm1731, %vm1732
        %v1734 = vsel %vm1733, %v1726, %v1730
        %v1735 = vand.u32 2147483647, %v1288
        %vm1736 = vcmp.eq.f32.partialorder %v1735, 8.507059e+37
        %v1737 = vand.u32 %v1288, 2147483648
        %v1738 = vor.u32 1.1754944e-38, %v1737
        %v1739 = vsel %vm1736, %v1738, %v1734
        %v1740 = vmul.f32 1.0, %v1739
        %v1741 = vrcp.pop %v1289
        %v1742 = vmul.f32 %v1289, %v1741
        %v1743 = vsub.f32 1.0, %v1742
        %v1744 = vmul.f32 %v1741, %v1743
        %v1745 = vadd.f32 %v1741, %v1744
        %vm1746 = vweird.f32 %v1289
        %vm1747 = vweird.f32 %v1741
        %vm1748 = vmor %vm1746, %vm1747
        %v1749 = vsel %vm1748, %v1741, %v1745
        %v1750 = vand.u32 2147483647, %v1289
        %vm1751 = vcmp.eq.f32.partialorder %v1750, 8.507059e+37
        %v1752 = vand.u32 %v1289, 2147483648
        %v1753 = vor.u32 1.1754944e-38, %v1752
        %v1754 = vsel %vm1751, %v1753, %v1749
        %v1755 = vmul.f32 1.0, %v1754
        %v1756 = vrcp.pop %v1290
        %v1757 = vmul.f32 %v1290, %v1756
        %v1758 = vsub.f32 1.0, %v1757
        %v1759 = vmul.f32 %v1756, %v1758
        %v1760 = vadd.f32 %v1756, %v1759
        %vm1761 = vweird.f32 %v1290
        %vm1762 = vweird.f32 %v1756
        %vm1763 = vmor %vm1761, %vm1762
        %v1764 = vsel %vm1763, %v1756, %v1760
        %v1765 = vand.u32 2147483647, %v1290
        %vm1766 = vcmp.eq.f32.partialorder %v1765, 8.507059e+37
        %v1767 = vand.u32 %v1290, 2147483648
        %v1768 = vor.u32 1.1754944e-38, %v1767
        %v1769 = vsel %vm1766, %v1768, %v1764
        %v1770 = vmul.f32 1.0, %v1769
        %v1771 = vmul.f32 %v637, %v1305
        %v1772 = vmul.f32 %v735, %v1320
        %v1773 = vmul.f32 %v639, %v1335
        %v1774 = vmul.f32 %v737, %v1350
        %v1775 = vmul.f32 %v642, %v1365
        %v1776 = vmul.f32 %v740, %v1380
        %v1777 = vmul.f32 %v644, %v1395
        %v1778 = vmul.f32 %v742, %v1410
        %v1779 = vmul.f32 %v647, %v1425
        %v1780 = vmul.f32 %v745, %v1440
        %v1781 = vmul.f32 %v649, %v1455
        %v1782 = vmul.f32 %v747, %v1470
        %v1783 = vmul.f32 %v652, %v1485
        %v1784 = vmul.f32 %v750, %v1500
        %v1785 = vmul.f32 %v654, %v1515
        %v1786 = vmul.f32 %v752, %v1530
        %v1787 = vmul.f32 %v657, %v1545
        %v1788 = vmul.f32 %v755, %v1560
        %v1789 = vmul.f32 %v659, %v1575
        %v1790 = vmul.f32 %v757, %v1590
        %v1791 = vmul.f32 %v662, %v1605
        %v1792 = vmul.f32 %v760, %v1620
        %v1793 = vmul.f32 %v664, %v1635
        %v1794 = vmul.f32 %v762, %v1650
        %v1795 = vmul.f32 %v667, %v1665
        %v1796 = vmul.f32 %v765, %v1680
        %v1797 = vmul.f32 %v669, %v1695
        %v1798 = vmul.f32 %v767, %v1710
        %v1799 = vmul.f32 %v672, %v1725
        %v1800 = vmul.f32 %v770, %v1740
        %v1801 = vmul.f32 %v674, %v1755
        %v1802 = vmul.f32 %v772, %v1770
        %v1803 = vmul.f32 %v1771, %v1026
        %v1804 = vmul.f32 %v1772, %v1124
        %v1805 = vmul.f32 %v1773, %v1028
        %v1806 = vmul.f32 %v1774, %v1126
        %v1807 = vmul.f32 %v1775, %v1031
        %v1808 = vmul.f32 %v1776, %v1129
        %v1809 = vmul.f32 %v1777, %v1033
        %v1810 = vmul.f32 %v1778, %v1131
        %v1811 = vmul.f32 %v1779, %v1036
        %v1812 = vmul.f32 %v1780, %v1134
        %v1813 = vmul.f32 %v1781, %v1038
        %v1814 = vmul.f32 %v1782, %v1136
        %v1815 = vmul.f32 %v1783, %v1041
        %v1816 = vmul.f32 %v1784, %v1139
        %v1817 = vmul.f32 %v1785, %v1043
        %v1818 = vmul.f32 %v1786, %v1141
        %v1819 = vmul.f32 %v1787, %v1046
        %v1820 = vmul.f32 %v1788, %v1144
        %v1821 = vmul.f32 %v1789, %v1048
        %v1822 = vmul.f32 %v1790, %v1146
        %v1823 = vmul.f32 %v1791, %v1051
        %v1824 = vmul.f32 %v1792, %v1149
        %v1825 = vmul.f32 %v1793, %v1053
        %v1826 = vmul.f32 %v1794, %v1151
        %v1827 = vmul.f32 %v1795, %v1056
        %v1828 = vmul.f32 %v1796, %v1154
        %v1829 = vmul.f32 %v1797, %v1058
        %v1830 = vmul.f32 %v1798, %v1156
        %v1831 = vmul.f32 %v1799, %v1061
        %v1832 = vmul.f32 %v1800, %v1159
        %v1833 = vmul.f32 %v1801, %v1063
        %v1834 = vmul.f32 %v1802, %v1161
        %v1835 = vpack.c.bf16 %v1805, %v1803
        %v1836 = vpack.c.bf16 %v1806, %v1804
        %v1837 = vpack.c.bf16 %v1809, %v1807
        %v1838 = vpack.c.bf16 %v1810, %v1808
        %v1839 = vpack.c.bf16 %v1813, %v1811
        %v1840 = vpack.c.bf16 %v1814, %v1812
        %v1841 = vpack.c.bf16 %v1817, %v1815
        %v1842 = vpack.c.bf16 %v1818, %v1816
        %v1843 = vpack.c.bf16 %v1821, %v1819
        %v1844 = vpack.c.bf16 %v1822, %v1820
        %v1845 = vpack.c.bf16 %v1825, %v1823
        %v1846 = vpack.c.bf16 %v1826, %v1824
        %v1847 = vpack.c.bf16 %v1829, %v1827
        %v1848 = vpack.c.bf16 %v1830, %v1828
        %v1849 = vpack.c.bf16 %v1833, %v1831
        %v1850 = vpack.c.bf16 %v1834, %v1832
        %v1851 = vld [vmem:[%s252] sm:$0xff]
        %v1852 = vld [vmem:[%s252 + $0x8] sm:$0xff]
        %v1853 = vld [vmem:[%s252 + $0x10] sm:$0xff]
        %v1854 = vld [vmem:[%s252 + $0x18] sm:$0xff]
        %v1855 = vld [vmem:[%s252 + $0x20] sm:$0xff]
        %v1856 = vld [vmem:[%s252 + $0x28] sm:$0xff]
        %v1857 = vld [vmem:[%s252 + $0x30] sm:$0xff]
        %v1858 = vld [vmem:[%s252 + $0x38] sm:$0xff]
        %v1859 = vld [vmem:[%s252 + $0x40] sm:$0xff]
        %v1860 = vld [vmem:[%s252 + $0x48] sm:$0xff]
        %v1861 = vld [vmem:[%s252 + $0x50] sm:$0xff]
        %v1862 = vld [vmem:[%s252 + $0x58] sm:$0xff]
        %v1863 = vld [vmem:[%s252 + $0x60] sm:$0xff]
        %v1864 = vld [vmem:[%s252 + $0x68] sm:$0xff]
        %v1865 = vld [vmem:[%s252 + $0x70] sm:$0xff]
        %v1866 = vld [vmem:[%s252 + $0x78] sm:$0xff]
        %v1867 = vld [vmem:[%s252 + $0x80] sm:$0xff]
        %v1868 = vld [vmem:[%s252 + $0x88] sm:$0xff]
        %v1869 = vld [vmem:[%s252 + $0x90] sm:$0xff]
        %v1870 = vld [vmem:[%s252 + $0x98] sm:$0xff]
        %v1871 = vld [vmem:[%s252 + $0xa0] sm:$0xff]
        %v1872 = vld [vmem:[%s252 + $0xa8] sm:$0xff]
        %v1873 = vld [vmem:[%s252 + $0xb0] sm:$0xff]
        %v1874 = vld [vmem:[%s252 + $0xb8] sm:$0xff]
        %v1875 = vld [vmem:[%s252 + $0xc0] sm:$0xff]
        %v1876 = vld [vmem:[%s252 + $0xc8] sm:$0xff]
        %v1877 = vld [vmem:[%s252 + $0xd0] sm:$0xff]
        %v1878 = vld [vmem:[%s252 + $0xd8] sm:$0xff]
        %v1879 = vld [vmem:[%s252 + $0xe0] sm:$0xff]
        %v1880 = vld [vmem:[%s252 + $0xe8] sm:$0xff]
        %v1881 = vld [vmem:[%s252 + $0xf0] sm:$0xff]
        %v1882 = vld [vmem:[%s252 + $0xf8] sm:$0xff]
        %v1915 = vunpack.c.l.b16 %v1851
        %v1916 = vunpack.c.h.b16 %v1851
        %v1917 = vunpack.c.l.b16 %v1852
        %v1918 = vunpack.c.h.b16 %v1852
        %v1919 = vunpack.c.l.b16 %v1853
        %v1920 = vunpack.c.h.b16 %v1853
        %v1921 = vunpack.c.l.b16 %v1854
        %v1922 = vunpack.c.h.b16 %v1854
        %v1923 = vunpack.c.l.b16 %v1855
        %v1924 = vunpack.c.h.b16 %v1855
        %v1925 = vunpack.c.l.b16 %v1856
        %v1926 = vunpack.c.h.b16 %v1856
        %v1927 = vunpack.c.l.b16 %v1857
        %v1928 = vunpack.c.h.b16 %v1857
        %v1929 = vunpack.c.l.b16 %v1858
        %v1930 = vunpack.c.h.b16 %v1858
        %v1931 = vunpack.c.l.b16 %v1859
        %v1932 = vunpack.c.h.b16 %v1859
        %v1933 = vunpack.c.l.b16 %v1860
        %v1934 = vunpack.c.h.b16 %v1860
        %v1935 = vunpack.c.l.b16 %v1861
        %v1936 = vunpack.c.h.b16 %v1861
        %v1937 = vunpack.c.l.b16 %v1862
        %v1938 = vunpack.c.h.b16 %v1862
        %v1939 = vunpack.c.l.b16 %v1863
        %v1940 = vunpack.c.h.b16 %v1863
        %v1941 = vunpack.c.l.b16 %v1864
        %v1942 = vunpack.c.h.b16 %v1864
        %v1943 = vunpack.c.l.b16 %v1865
        %v1944 = vunpack.c.h.b16 %v1865
        %v1945 = vunpack.c.l.b16 %v1866
        %v1946 = vunpack.c.h.b16 %v1866
        %v1947 = vunpack.c.l.b16 %v1867
        %v1948 = vunpack.c.h.b16 %v1867
        %v1949 = vunpack.c.l.b16 %v1868
        %v1950 = vunpack.c.h.b16 %v1868
        %v1951 = vunpack.c.l.b16 %v1869
        %v1952 = vunpack.c.h.b16 %v1869
        %v1953 = vunpack.c.l.b16 %v1870
        %v1954 = vunpack.c.h.b16 %v1870
        %v1955 = vunpack.c.l.b16 %v1871
        %v1956 = vunpack.c.h.b16 %v1871
        %v1957 = vunpack.c.l.b16 %v1872
        %v1958 = vunpack.c.h.b16 %v1872
        %v1959 = vunpack.c.l.b16 %v1873
        %v1960 = vunpack.c.h.b16 %v1873
        %v1961 = vunpack.c.l.b16 %v1874
        %v1962 = vunpack.c.h.b16 %v1874
        %v1963 = vunpack.c.l.b16 %v1875
        %v1964 = vunpack.c.h.b16 %v1875
        %v1965 = vunpack.c.l.b16 %v1876
        %v1966 = vunpack.c.h.b16 %v1876
        %v1967 = vunpack.c.l.b16 %v1877
        %v1968 = vunpack.c.h.b16 %v1877
        %v1969 = vunpack.c.l.b16 %v1878
        %v1970 = vunpack.c.h.b16 %v1878
        %v1971 = vunpack.c.l.b16 %v1879
        %v1972 = vunpack.c.h.b16 %v1879
        %v1973 = vunpack.c.l.b16 %v1880
        %v1974 = vunpack.c.h.b16 %v1880
        %v1975 = vunpack.c.l.b16 %v1881
        %v1976 = vunpack.c.h.b16 %v1881
        %v1977 = vunpack.c.l.b16 %v1882
        %v1978 = vunpack.c.h.b16 %v1882
        %v1979 = vpack.c.b16 %v1917, %v1915
        %v1980 = vpack.c.b16 %v1918, %v1916
        %v1981 = vpack.c.b16 %v1921, %v1919
        %v1982 = vpack.c.b16 %v1922, %v1920
        %v1983 = vpack.c.b16 %v1925, %v1923
        %v1984 = vpack.c.b16 %v1926, %v1924
        %v1985 = vpack.c.b16 %v1929, %v1927
        %v1986 = vpack.c.b16 %v1930, %v1928
        %v1987 = vpack.c.b16 %v1933, %v1931
        %v1988 = vpack.c.b16 %v1934, %v1932
        %v1989 = vpack.c.b16 %v1937, %v1935
        %v1990 = vpack.c.b16 %v1938, %v1936
        %v1991 = vpack.c.b16 %v1941, %v1939
        %v1992 = vpack.c.b16 %v1942, %v1940
        %v1993 = vpack.c.b16 %v1945, %v1943
        %v1994 = vpack.c.b16 %v1946, %v1944
        %v1995 = vpack.c.b16 %v1949, %v1947
        %v1996 = vpack.c.b16 %v1950, %v1948
        %v1997 = vpack.c.b16 %v1953, %v1951
        %v1998 = vpack.c.b16 %v1954, %v1952
        %v1999 = vpack.c.b16 %v1957, %v1955
        %v2000 = vpack.c.b16 %v1958, %v1956
        %v2001 = vpack.c.b16 %v1961, %v1959
        %v2002 = vpack.c.b16 %v1962, %v1960
        %v2003 = vpack.c.b16 %v1965, %v1963
        %v2004 = vpack.c.b16 %v1966, %v1964
        %v2005 = vpack.c.b16 %v1969, %v1967
        %v2006 = vpack.c.b16 %v1970, %v1968
        %v2007 = vpack.c.b16 %v1973, %v1971
        %v2008 = vpack.c.b16 %v1974, %v1972
        %v2009 = vpack.c.b16 %v1977, %v1975
        %v2010 = vpack.c.b16 %v1978, %v1976
        %2043 = vmatpush.bf16.msra.mxu0 %v1993
        %2044 = vmatpush.bf16.msra.mxu0 %v1991
        %2045 = vmatpush.bf16.msra.mxu0 %v1989
        %2046 = vmatpush.bf16.msra.mxu0 %v1987
        %2047 = vmatpush.bf16.msra.mxu0 %v1985
        %2048 = vmatpush.bf16.msra.mxu0 %v1983
        %2049 = vmatpush.bf16.msra.mxu0 %v1981
        %2050 = vmatpush.bf16.msra.mxu0 %v1979
        %2051 = vmatmul.bf16.gmra.mxu0 %v1835
        %v2052 = vpop.f32.mrf.mxu0
        %v2053 = vadd.f32 0.0, %v2052
        %v2054 = vpop.f32.mrf.mxu0
        %v2055 = vadd.f32 0.0, %v2054
        %2056 = vmatmul.bf16.gmra.mxu0 %v1837
        %v2057 = vpop.f32.mrf.mxu0
        %v2058 = vadd.f32 0.0, %v2057
        %v2059 = vpop.f32.mrf.mxu0
        %v2060 = vadd.f32 0.0, %v2059
        %2061 = vmatmul.bf16.gmra.mxu0 %v1839
        %v2062 = vpop.f32.mrf.mxu0
        %v2063 = vadd.f32 0.0, %v2062
        %v2064 = vpop.f32.mrf.mxu0
        %v2065 = vadd.f32 0.0, %v2064
        %2066 = vmatmul.bf16.gmra.mxu0 %v1841
        %v2067 = vpop.f32.mrf.mxu0
        %v2068 = vadd.f32 0.0, %v2067
        %v2069 = vpop.f32.mrf.mxu0
        %v2070 = vadd.f32 0.0, %v2069
        %2071 = vmatmul.bf16.gmra.mxu0 %v1843
        %v2072 = vpop.f32.mrf.mxu0
        %v2073 = vadd.f32 0.0, %v2072
        %v2074 = vpop.f32.mrf.mxu0
        %v2075 = vadd.f32 0.0, %v2074
        %2076 = vmatmul.bf16.gmra.mxu0 %v1845
        %v2077 = vpop.f32.mrf.mxu0
        %v2078 = vadd.f32 0.0, %v2077
        %v2079 = vpop.f32.mrf.mxu0
        %v2080 = vadd.f32 0.0, %v2079
        %2081 = vmatmul.bf16.gmra.mxu0 %v1847
        %v2082 = vpop.f32.mrf.mxu0
        %v2083 = vadd.f32 0.0, %v2082
        %v2084 = vpop.f32.mrf.mxu0
        %v2085 = vadd.f32 0.0, %v2084
        %2086 = vmatmul.bf16.gmra.mxu0 %v1849
        %v2087 = vpop.f32.mrf.mxu0
        %v2088 = vadd.f32 0.0, %v2087
        %v2089 = vpop.f32.mrf.mxu0
        %v2090 = vadd.f32 0.0, %v2089
        %2091 = vdwg.mxu0
        %2092 = vmatpush.bf16.msra.mxu0 %v2009
        %2093 = vmatpush.bf16.msra.mxu0 %v2007
        %2094 = vmatpush.bf16.msra.mxu0 %v2005
        %2095 = vmatpush.bf16.msra.mxu0 %v2003
        %2096 = vmatpush.bf16.msra.mxu0 %v2001
        %2097 = vmatpush.bf16.msra.mxu0 %v1999
        %2098 = vmatpush.bf16.msra.mxu0 %v1997
        %2099 = vmatpush.bf16.msra.mxu0 %v1995
        %2100 = vmatmul.bf16.gmra.mxu0 %v1836
        %v2101 = vpop.f32.mrf.mxu0
        %v2102 = vadd.f32 %v2053, %v2101
        %v2103 = vpop.f32.mrf.mxu0
        %v2104 = vadd.f32 %v2055, %v2103
        %2105 = vmatmul.bf16.gmra.mxu0 %v1838
        %v2106 = vpop.f32.mrf.mxu0
        %v2107 = vadd.f32 %v2058, %v2106
        %v2108 = vpop.f32.mrf.mxu0
        %v2109 = vadd.f32 %v2060, %v2108
        %2110 = vmatmul.bf16.gmra.mxu0 %v1840
        %v2111 = vpop.f32.mrf.mxu0
        %v2112 = vadd.f32 %v2063, %v2111
        %v2113 = vpop.f32.mrf.mxu0
        %v2114 = vadd.f32 %v2065, %v2113
        %2115 = vmatmul.bf16.gmra.mxu0 %v1842
        %v2116 = vpop.f32.mrf.mxu0
        %v2117 = vadd.f32 %v2068, %v2116
        %v2118 = vpop.f32.mrf.mxu0
        %v2119 = vadd.f32 %v2070, %v2118
        %2120 = vmatmul.bf16.gmra.mxu0 %v1844
        %v2121 = vpop.f32.mrf.mxu0
        %v2122 = vadd.f32 %v2073, %v2121
        %v2123 = vpop.f32.mrf.mxu0
        %v2124 = vadd.f32 %v2075, %v2123
        %2125 = vmatmul.bf16.gmra.mxu0 %v1846
        %v2126 = vpop.f32.mrf.mxu0
        %v2127 = vadd.f32 %v2078, %v2126
        %v2128 = vpop.f32.mrf.mxu0
        %v2129 = vadd.f32 %v2080, %v2128
        %2130 = vmatmul.bf16.gmra.mxu0 %v1848
        %v2131 = vpop.f32.mrf.mxu0
        %v2132 = vadd.f32 %v2083, %v2131
        %v2133 = vpop.f32.mrf.mxu0
        %v2134 = vadd.f32 %v2085, %v2133
        %2135 = vmatmul.bf16.gmra.mxu0 %v1850
        %v2136 = vpop.f32.mrf.mxu0
        %v2137 = vadd.f32 %v2088, %v2136
        %v2138 = vpop.f32.mrf.mxu0
        %v2139 = vadd.f32 %v2090, %v2138
        %2140 = vdwg.mxu0
        %2141 = vmatpush.bf16.msra.mxu0 %v1994
        %2142 = vmatpush.bf16.msra.mxu0 %v1992
        %2143 = vmatpush.bf16.msra.mxu0 %v1990
        %2144 = vmatpush.bf16.msra.mxu0 %v1988
        %2145 = vmatpush.bf16.msra.mxu0 %v1986
        %2146 = vmatpush.bf16.msra.mxu0 %v1984
        %2147 = vmatpush.bf16.msra.mxu0 %v1982
        %2148 = vmatpush.bf16.msra.mxu0 %v1980
        %2149 = vmatmul.bf16.gmra.mxu0 %v1835
        %v2150 = vpop.f32.mrf.mxu0
        %v2151 = vadd.f32 0.0, %v2150
        %v2152 = vpop.f32.mrf.mxu0
        %v2153 = vadd.f32 0.0, %v2152
        %2154 = vmatmul.bf16.gmra.mxu0 %v1837
        %v2155 = vpop.f32.mrf.mxu0
        %v2156 = vadd.f32 0.0, %v2155
        %v2157 = vpop.f32.mrf.mxu0
        %v2158 = vadd.f32 0.0, %v2157
        %2159 = vmatmul.bf16.gmra.mxu0 %v1839
        %v2160 = vpop.f32.mrf.mxu0
        %v2161 = vadd.f32 0.0, %v2160
        %v2162 = vpop.f32.mrf.mxu0
        %v2163 = vadd.f32 0.0, %v2162
        %2164 = vmatmul.bf16.gmra.mxu0 %v1841
        %v2165 = vpop.f32.mrf.mxu0
        %v2166 = vadd.f32 0.0, %v2165
        %v2167 = vpop.f32.mrf.mxu0
        %v2168 = vadd.f32 0.0, %v2167
        %2169 = vmatmul.bf16.gmra.mxu0 %v1843
        %v2170 = vpop.f32.mrf.mxu0
        %v2171 = vadd.f32 0.0, %v2170
        %v2172 = vpop.f32.mrf.mxu0
        %v2173 = vadd.f32 0.0, %v2172
        %2174 = vmatmul.bf16.gmra.mxu0 %v1845
        %v2175 = vpop.f32.mrf.mxu0
        %v2176 = vadd.f32 0.0, %v2175
        %v2177 = vpop.f32.mrf.mxu0
        %v2178 = vadd.f32 0.0, %v2177
        %2179 = vmatmul.bf16.gmra.mxu0 %v1847
        %v2180 = vpop.f32.mrf.mxu0
        %v2181 = vadd.f32 0.0, %v2180
        %v2182 = vpop.f32.mrf.mxu0
        %v2183 = vadd.f32 0.0, %v2182
        %2184 = vmatmul.bf16.gmra.mxu0 %v1849
        %v2185 = vpop.f32.mrf.mxu0
        %v2186 = vadd.f32 0.0, %v2185
        %v2187 = vpop.f32.mrf.mxu0
        %v2188 = vadd.f32 0.0, %v2187
        %2189 = vdwg.mxu0
        %2190 = vmatpush.bf16.msra.mxu0 %v2010
        %2191 = vmatpush.bf16.msra.mxu0 %v2008
        %2192 = vmatpush.bf16.msra.mxu0 %v2006
        %2193 = vmatpush.bf16.msra.mxu0 %v2004
        %2194 = vmatpush.bf16.msra.mxu0 %v2002
        %2195 = vmatpush.bf16.msra.mxu0 %v2000
        %2196 = vmatpush.bf16.msra.mxu0 %v1998
        %2197 = vmatpush.bf16.msra.mxu0 %v1996
        %2198 = vmatmul.bf16.gmra.mxu0 %v1836
        %v2199 = vpop.f32.mrf.mxu0
        %v2200 = vadd.f32 %v2151, %v2199
        %v2201 = vpop.f32.mrf.mxu0
        %v2202 = vadd.f32 %v2153, %v2201
        %2203 = vmatmul.bf16.gmra.mxu0 %v1838
        %v2204 = vpop.f32.mrf.mxu0
        %v2205 = vadd.f32 %v2156, %v2204
        %v2206 = vpop.f32.mrf.mxu0
        %v2207 = vadd.f32 %v2158, %v2206
        %2208 = vmatmul.bf16.gmra.mxu0 %v1840
        %v2209 = vpop.f32.mrf.mxu0
        %v2210 = vadd.f32 %v2161, %v2209
        %v2211 = vpop.f32.mrf.mxu0
        %v2212 = vadd.f32 %v2163, %v2211
        %2213 = vmatmul.bf16.gmra.mxu0 %v1842
        %v2214 = vpop.f32.mrf.mxu0
        %v2215 = vadd.f32 %v2166, %v2214
        %v2216 = vpop.f32.mrf.mxu0
        %v2217 = vadd.f32 %v2168, %v2216
        %2218 = vmatmul.bf16.gmra.mxu0 %v1844
        %v2219 = vpop.f32.mrf.mxu0
        %v2220 = vadd.f32 %v2171, %v2219
        %v2221 = vpop.f32.mrf.mxu0
        %v2222 = vadd.f32 %v2173, %v2221
        %2223 = vmatmul.bf16.gmra.mxu0 %v1846
        %v2224 = vpop.f32.mrf.mxu0
        %v2225 = vadd.f32 %v2176, %v2224
        %v2226 = vpop.f32.mrf.mxu0
        %v2227 = vadd.f32 %v2178, %v2226
        %2228 = vmatmul.bf16.gmra.mxu0 %v1848
        %v2229 = vpop.f32.mrf.mxu0
        %v2230 = vadd.f32 %v2181, %v2229
        %v2231 = vpop.f32.mrf.mxu0
        %v2232 = vadd.f32 %v2183, %v2231
        %2233 = vmatmul.bf16.gmra.mxu0 %v1850
        %v2234 = vpop.f32.mrf.mxu0
        %v2235 = vadd.f32 %v2186, %v2234
        %v2236 = vpop.f32.mrf.mxu0
        %v2237 = vadd.f32 %v2188, %v2236
        %2238 = vdwg.mxu0
        %p2239 = scmp.eq.s32.totalorder %s28, 0
        // Predicated region
        $region45: #{tpu_custom_call.1} parent=31 // pred_check
          %p2240 = pneg %p2239
        $region46: #{tpu_custom_call.1} parent=31 // pred_check_branch
          %2242 = sbr.rel (%p2240) target = $region48
        $region47: #{tpu_custom_call.1} parent=31 // pred_region
          %2243 = vst [vmem:[%s285] sm:$0xff] %v2102
          %2244 = vst [vmem:[%s285 + $0x8] sm:$0xff] %v2200
          %2245 = vst [vmem:[%s285 + $0x10] sm:$0xff] %v2104
          %2246 = vst [vmem:[%s285 + $0x18] sm:$0xff] %v2202
          %2247 = vst [vmem:[%s285 + $0x20] sm:$0xff] %v2107
          %2248 = vst [vmem:[%s285 + $0x28] sm:$0xff] %v2205
          %2249 = vst [vmem:[%s285 + $0x30] sm:$0xff] %v2109
          %2250 = vst [vmem:[%s285 + $0x38] sm:$0xff] %v2207
          %2251 = vst [vmem:[%s285 + $0x40] sm:$0xff] %v2112
          %2252 = vst [vmem:[%s285 + $0x48] sm:$0xff] %v2210
          %2253 = vst [vmem:[%s285 + $0x50] sm:$0xff] %v2114
          %2254 = vst [vmem:[%s285 + $0x58] sm:$0xff] %v2212
          %2255 = vst [vmem:[%s285 + $0x60] sm:$0xff] %v2117
          %2256 = vst [vmem:[%s285 + $0x68] sm:$0xff] %v2215
          %2257 = vst [vmem:[%s285 + $0x70] sm:$0xff] %v2119
          %2258 = vst [vmem:[%s285 + $0x78] sm:$0xff] %v2217
          %2259 = vst [vmem:[%s285 + $0x80] sm:$0xff] %v2122
          %2260 = vst [vmem:[%s285 + $0x88] sm:$0xff] %v2220
          %2261 = vst [vmem:[%s285 + $0x90] sm:$0xff] %v2124
          %2262 = vst [vmem:[%s285 + $0x98] sm:$0xff] %v2222
          %2263 = vst [vmem:[%s285 + $0xa0] sm:$0xff] %v2127
          %2264 = vst [vmem:[%s285 + $0xa8] sm:$0xff] %v2225
          %2265 = vst [vmem:[%s285 + $0xb0] sm:$0xff] %v2129
          %2266 = vst [vmem:[%s285 + $0xb8] sm:$0xff] %v2227
          %2267 = vst [vmem:[%s285 + $0xc0] sm:$0xff] %v2132
          %2268 = vst [vmem:[%s285 + $0xc8] sm:$0xff] %v2230
          %2269 = vst [vmem:[%s285 + $0xd0] sm:$0xff] %v2134
          %2270 = vst [vmem:[%s285 + $0xd8] sm:$0xff] %v2232
          %2271 = vst [vmem:[%s285 + $0xe0] sm:$0xff] %v2137
          %2272 = vst [vmem:[%s285 + $0xe8] sm:$0xff] %v2235
          %2273 = vst [vmem:[%s285 + $0xf0] sm:$0xff] %v2139
          %2274 = vst [vmem:[%s285 + $0xf8] sm:$0xff] %v2237
        $region48: #{tpu_custom_call.1} parent=31 // pred_fallthru
          _
        %p2275 = scmp.gt.s32.totalorder %s28, 0
        // Predicated region
        $region49: #{tpu_custom_call.1} parent=31 // pred_check
          %p2276 = pneg %p2275
        $region50: #{tpu_custom_call.1} parent=31 // pred_check_branch
          %2278 = sbr.rel (%p2276) target = $region52
        $region51: #{tpu_custom_call.1} parent=31 // pred_region
          %v2279 = vld [vmem:[%s285] sm:$0xff]
          %v2280 = vld [vmem:[%s285 + $0x8] sm:$0xff]
          %v2281 = vld [vmem:[%s285 + $0x10] sm:$0xff]
          %v2282 = vld [vmem:[%s285 + $0x18] sm:$0xff]
          %v2283 = vld [vmem:[%s285 + $0x20] sm:$0xff]
          %v2284 = vld [vmem:[%s285 + $0x28] sm:$0xff]
          %v2285 = vld [vmem:[%s285 + $0x30] sm:$0xff]
          %v2286 = vld [vmem:[%s285 + $0x38] sm:$0xff]
          %v2287 = vld [vmem:[%s285 + $0x40] sm:$0xff]
          %v2288 = vld [vmem:[%s285 + $0x48] sm:$0xff]
          %v2289 = vld [vmem:[%s285 + $0x50] sm:$0xff]
          %v2290 = vld [vmem:[%s285 + $0x58] sm:$0xff]
          %v2291 = vld [vmem:[%s285 + $0x60] sm:$0xff]
          %v2292 = vld [vmem:[%s285 + $0x68] sm:$0xff]
          %v2293 = vld [vmem:[%s285 + $0x70] sm:$0xff]
          %v2294 = vld [vmem:[%s285 + $0x78] sm:$0xff]
          %v2295 = vld [vmem:[%s285 + $0x80] sm:$0xff]
          %v2296 = vld [vmem:[%s285 + $0x88] sm:$0xff]
          %v2297 = vld [vmem:[%s285 + $0x90] sm:$0xff]
          %v2298 = vld [vmem:[%s285 + $0x98] sm:$0xff]
          %v2299 = vld [vmem:[%s285 + $0xa0] sm:$0xff]
          %v2300 = vld [vmem:[%s285 + $0xa8] sm:$0xff]
          %v2301 = vld [vmem:[%s285 + $0xb0] sm:$0xff]
          %v2302 = vld [vmem:[%s285 + $0xb8] sm:$0xff]
          %v2303 = vld [vmem:[%s285 + $0xc0] sm:$0xff]
          %v2304 = vld [vmem:[%s285 + $0xc8] sm:$0xff]
          %v2305 = vld [vmem:[%s285 + $0xd0] sm:$0xff]
          %v2306 = vld [vmem:[%s285 + $0xd8] sm:$0xff]
          %v2307 = vld [vmem:[%s285 + $0xe0] sm:$0xff]
          %v2308 = vld [vmem:[%s285 + $0xe8] sm:$0xff]
          %v2309 = vld [vmem:[%s285 + $0xf0] sm:$0xff]
          %v2310 = vld [vmem:[%s285 + $0xf8] sm:$0xff]
          %v2311 = vadd.f32 %v2279, %v2102
          %v2312 = vadd.f32 %v2280, %v2200
          %v2313 = vadd.f32 %v2281, %v2104
          %v2314 = vadd.f32 %v2282, %v2202
          %v2315 = vadd.f32 %v2283, %v2107
          %v2316 = vadd.f32 %v2284, %v2205
          %v2317 = vadd.f32 %v2285, %v2109
          %v2318 = vadd.f32 %v2286, %v2207
          %v2319 = vadd.f32 %v2287, %v2112
          %v2320 = vadd.f32 %v2288, %v2210
          %v2321 = vadd.f32 %v2289, %v2114
          %v2322 = vadd.f32 %v2290, %v2212
          %v2323 = vadd.f32 %v2291, %v2117
          %v2324 = vadd.f32 %v2292, %v2215
          %v2325 = vadd.f32 %v2293, %v2119
          %v2326 = vadd.f32 %v2294, %v2217
          %v2327 = vadd.f32 %v2295, %v2122
          %v2328 = vadd.f32 %v2296, %v2220
          %v2329 = vadd.f32 %v2297, %v2124
          %v2330 = vadd.f32 %v2298, %v2222
          %v2331 = vadd.f32 %v2299, %v2127
          %v2332 = vadd.f32 %v2300, %v2225
          %v2333 = vadd.f32 %v2301, %v2129
          %v2334 = vadd.f32 %v2302, %v2227
          %v2335 = vadd.f32 %v2303, %v2132
          %v2336 = vadd.f32 %v2304, %v2230
          %v2337 = vadd.f32 %v2305, %v2134
          %v2338 = vadd.f32 %v2306, %v2232
          %v2339 = vadd.f32 %v2307, %v2137
          %v2340 = vadd.f32 %v2308, %v2235
          %v2341 = vadd.f32 %v2309, %v2139
          %v2342 = vadd.f32 %v2310, %v2237
          %2343 = vst [vmem:[%s285] sm:$0xff] %v2311
          %2344 = vst [vmem:[%s285 + $0x8] sm:$0xff] %v2312
          %2345 = vst [vmem:[%s285 + $0x10] sm:$0xff] %v2313
          %2346 = vst [vmem:[%s285 + $0x18] sm:$0xff] %v2314
          %2347 = vst [vmem:[%s285 + $0x20] sm:$0xff] %v2315
          %2348 = vst [vmem:[%s285 + $0x28] sm:$0xff] %v2316
          %2349 = vst [vmem:[%s285 + $0x30] sm:$0xff] %v2317
          %2350 = vst [vmem:[%s285 + $0x38] sm:$0xff] %v2318
          %2351 = vst [vmem:[%s285 + $0x40] sm:$0xff] %v2319
          %2352 = vst [vmem:[%s285 + $0x48] sm:$0xff] %v2320
          %2353 = vst [vmem:[%s285 + $0x50] sm:$0xff] %v2321
          %2354 = vst [vmem:[%s285 + $0x58] sm:$0xff] %v2322
          %2355 = vst [vmem:[%s285 + $0x60] sm:$0xff] %v2323
          %2356 = vst [vmem:[%s285 + $0x68] sm:$0xff] %v2324
          %2357 = vst [vmem:[%s285 + $0x70] sm:$0xff] %v2325
          %2358 = vst [vmem:[%s285 + $0x78] sm:$0xff] %v2326
          %2359 = vst [vmem:[%s285 + $0x80] sm:$0xff] %v2327
          %2360 = vst [vmem:[%s285 + $0x88] sm:$0xff] %v2328
          %2361 = vst [vmem:[%s285 + $0x90] sm:$0xff] %v2329
          %2362 = vst [vmem:[%s285 + $0x98] sm:$0xff] %v2330
          %2363 = vst [vmem:[%s285 + $0xa0] sm:$0xff] %v2331
          %2364 = vst [vmem:[%s285 + $0xa8] sm:$0xff] %v2332
          %2365 = vst [vmem:[%s285 + $0xb0] sm:$0xff] %v2333
          %2366 = vst [vmem:[%s285 + $0xb8] sm:$0xff] %v2334
          %2367 = vst [vmem:[%s285 + $0xc0] sm:$0xff] %v2335
          %2368 = vst [vmem:[%s285 + $0xc8] sm:$0xff] %v2336
          %2369 = vst [vmem:[%s285 + $0xd0] sm:$0xff] %v2337
          %2370 = vst [vmem:[%s285 + $0xd8] sm:$0xff] %v2338
          %2371 = vst [vmem:[%s285 + $0xe0] sm:$0xff] %v2339
          %2372 = vst [vmem:[%s285 + $0xe8] sm:$0xff] %v2340
          %2373 = vst [vmem:[%s285 + $0xf0] sm:$0xff] %v2341
          %2374 = vst [vmem:[%s285 + $0xf8] sm:$0xff] %v2342
        $region52: #{tpu_custom_call.1} parent=31 // pred_fallthru
          _
        %s2375 = sand.u32 %s121, 1
        %s2376 = scalar_lea.sflag [#allocation4], %s2375
        %s2377 = sand.u32 %s121, 1
        %s2378 = smul.addr %s2377, 256
        %s2379 = scalar_lea.vmem [#allocation8], %s2378
        // Predicated region
        $region53: #{tpu_custom_call.1} parent=31 // pred_check
          %p2380 = pneg %p131
        $region54: #{tpu_custom_call.1} parent=31 // pred_check_branch
          %2382 = sbr.rel (%p2380) target = $region56
        $region55: #{tpu_custom_call.1} parent=31 // pred_region
          %s2383 = smul.u32 16, %s27
          %2385 = vsyncadd %s2376, 0
          %s2386 = smul.addr %s2383, 2
          %s2387 = smul.addr %s2386, 8
          %s2388 = scalar_lea.hbm %s3, %s2387
          %s2389 = sshll.u32 %s2379, 4
          %s2390 = int_to_ptr.vmem [resolvable:$true] %s2389
          %s2391 = sshll.u32 %s2388, 4
          %s2392 = int_to_ptr.hbm [resolvable:$true] %s2391
          %2397 = dma.vmem_to_hbm [thread:$0]  %s2390, 4096, %s2392, %s2376, 256, 256, 16
        $region56: #{tpu_custom_call.1} parent=31 // pred_fallthru
          _
      $region32: #{tpu_custom_call.1} parent=5 // pred_fallthru
        _
      %p2398 = scmp.le.s32.totalorder 2, %s18
      // Predicated region
      $region57: #{tpu_custom_call.1} parent=5 // pred_check
        %p2399 = pneg %p2398
      $region58: #{tpu_custom_call.1} parent=5 // pred_check_branch
        %2401 = sbr.rel (%p2399) target = $region60
      $region59: #{tpu_custom_call.1} parent=5 // pred_region
        %s2402 = ssub.s32 %s18, 2
        // Predicated region
        $region61: #{tpu_custom_call.1} parent=59 // pred_check
          %p2403 = pneg %p137
        $region62: #{tpu_custom_call.1} parent=59 // pred_check_branch
          %2405 = sbr.rel (%p2403) target = $region64
        $region63: #{tpu_custom_call.1} parent=59 // pred_region
          %s2406 = sand.u32 %s122, 1
          %s2407 = scalar_lea.sflag [#allocation4], %s2406
          %s2408 = sand.u32 %s122, 1
          %s2409 = smul.addr %s2408, 256
          %s2410 = scalar_lea.vmem [#allocation8], %s2409
          %2412 = dma.done %s2407, 4096
        $region64: #{tpu_custom_call.1} parent=59 // pred_fallthru
          _
      $region60: #{tpu_custom_call.1} parent=5 // pred_fallthru
        _
    $region6: #{tpu_custom_call.1} parent=1 // loop_footer
      %s22 = sadd.s32 1, %s18
    $region7: #{tpu_custom_call.1} parent=1 // loop_footer_branch
      %17 = sbr.rel target = $region3
    $region8: #{tpu_custom_call.1} parent=1 // loop_exit
      _
    %2413 = vsyncpa [#allocation3], 1
    %s2414 = scalar_lea.sflag [#allocation3], 1
    %2415 = vsyncpa %s2414, 1
    %2416 = vsyncpa [#allocation6], 1
    %s2417 = scalar_lea.sflag [#allocation6], 1
    %2418 = vsyncpa %s2417, 1
    %2419 = vsyncpa [#allocation4], 1
    %s2420 = scalar_lea.sflag [#allocation4], 1
    %2421 = vsyncpa %s2420, 1

</llo_original>
